<compile_context>
chip_gen: v6e
topology: v6e:2x2x1
jax: 0.10.0
libtpu: 0.0.40
codegen_flags: <defaults>
</compile_context>

<pallas_src>
from functools import partial

import jax
import jax.numpy as jnp
from jax.experimental import pallas as pl
from jax.experimental.pallas import tpu as pltpu


# --------------------------------------------------------------------------- #
# Kernel
# --------------------------------------------------------------------------- #
def _make_camil_kernel(*, gated: bool, fused: bool, flat_t: bool,
                       bb: int, n: int, d: int, a: int):
    """One grid step processes `bb` bags of `n` instances."""

    def kernel(*refs):
        if gated and not fused:
            (t_ref, m_ref, mask_ref, w1_ref, b1_ref,
             wg_ref, bg_ref, w2_ref, z_ref, f_ref) = refs
        else:
            (t_ref, m_ref, mask_ref, w1_ref, b1_ref,
             w2_ref, z_ref, f_ref) = refs

        # ---- fc1 (/ fc_gated): one (bb*n, d) x (d, a|2a) MXU matmul ---------
        t2 = t_ref[...] if flat_t else t_ref[...].reshape(bb * n, d)
        if gated and fused:
            hc = (jnp.dot(t2, w1_ref[...], preferred_element_type=jnp.float32)
                  + b1_ref[...])                                   # (bb*n, 2a)
            h = jnp.tanh(hc[:, :a]) * jax.nn.sigmoid(hc[:, a:])
        else:
            h = jnp.tanh(jnp.dot(t2, w1_ref[...],
                                 preferred_element_type=jnp.float32)
                         + b1_ref[...])                            # (bb*n, a)
            if gated:
                h = h * jax.nn.sigmoid(
                    jnp.dot(t2, wg_ref[...],
                            preferred_element_type=jnp.float32) + bg_ref[...])

        # ---- logits f = H @ w2: VPU multiply + lane reduce, lane-dense ------
        f3 = jnp.sum(h * w2_ref[...], axis=-1,
                     keepdims=True).reshape(bb, 1, n)              # (bb, 1, n)
        f_ref[...] = f3.astype(f_ref.dtype)

        # ---- masked softmax over the bag axis (lanes), f32 throughout -------
        fm = jnp.where(mask_ref[...] > 0, f3, jnp.float32(-1e30))
        fmax = jnp.max(fm, axis=-1, keepdims=True)
        p = jnp.exp(fm - fmax)                                     # un-normalised
        s = jnp.sum(p, axis=-1, keepdims=True)                     # (bb, 1, 1)

        # ---- pooling z = a @ M: batched MXU matmul in M's dtype, f32 acc,
        #      normalised AFTER pooling (bb*D scaled values instead of bb*N) --
        zu = jnp.einsum("bqn,bnd->bqd", p.astype(m_ref.dtype), m_ref[...],
                        preferred_element_type=jnp.float32)        # (bb, 1, d)
        z_ref[...] = (zu * (1.0 / s)).astype(z_ref.dtype)

    return kernel


# --------------------------------------------------------------------------- #
# Block / VMEM sizing
# --------------------------------------------------------------------------- #
def _vmem_limit_bytes() -> int:
    try:
        cap = int(pltpu.get_tpu_info().vmem_capacity_bytes)
    except Exception:
        cap = 64 * 1024 * 1024            # conservative: v7x per-TensorCore VMEM
    # Leave headroom for compiler scratch: 128 MiB parts -> 96 MiB, v7x -> 48 MiB.
    return max(32 * 1024 * 1024, min(int(cap * 0.75), 112 * 1024 * 1024))


def _auto_block_bags(batch: int, n: int, d: int, itemsize: int,
                     vmem_limit: int) -> int:
    bag_bytes = max(1, n * d * itemsize)          # one bag of T (M is the same)
    # HBM-bound: size blocks by bytes, not MXU rows.  ~4 MiB per T / M block
    # amortises the ~0.35 us per-step overhead; double-buffered T+M (4 buffers)
    # stay within ~half the VMEM limit (rest: weights + f32 intermediates).
    per_buf = min(4 * 1024 * 1024, vmem_limit // 8)
    bb = min(batch, max(1, per_buf // bag_bytes))
    # Keep >= 4 grid steps (>= 2 per v7x TensorCore) while blocks stay >= 1 MiB.
    min_bb = max(1, (1024 * 1024) // bag_bytes)
    if batch >= 4 * min_bb:
        bb = min(bb, max(batch // 4, min_bb))
    return max(1, bb)


# --------------------------------------------------------------------------- #
# Wrapper
# --------------------------------------------------------------------------- #
@partial(jax.jit, static_argnames=("gated", "block_bags", "single_buffer_weights"))
def _camil_forward(T, M, mask, W1, b1, Wg, bg, w2, *, gated, block_bags,
                   single_buffer_weights):
    B, N, D = T.shape
    A = W1.shape[1]
    cdtype = T.dtype
    itemsize = jnp.dtype(cdtype).itemsize

    vmem_limit = _vmem_limit_bytes()
    bb = (block_bags if block_bags is not None
          else _auto_block_bags(B, N, D, itemsize, vmem_limit))
    bb = max(1, min(bb, B))
    grid = (pl.cdiv(B, bb),)

    # Flat (B*N, D) streaming of T when the 2-D block is sublane-aligned
    # (free reshape under jit); otherwise 3-D block + in-kernel reshape.
    sublane = 8 * max(1, 4 // itemsize)           # 8 for f32, 16 for bf16
    flat_t = (bb == B) or ((bb * N) % sublane == 0)
    fused = gated and (A % 128 == 0)

    mask3 = mask.astype(jnp.float32)[:, None, :]                   # (B, 1, N)

    if fused:
        Wa = jnp.concatenate([W1, Wg], axis=1).astype(cdtype)      # (D, 2A)
        ba = jnp.concatenate([b1, bg]).reshape(1, 2 * A).astype(jnp.float32)
    else:
        Wa = W1.astype(cdtype)
        ba = b1.reshape(1, A).astype(jnp.float32)
    w2r = w2.reshape(1, A).astype(jnp.float32)

    def w_spec(shape):
        idx = lambda b: (0, 0)
        if single_buffer_weights:
            # Grid-invariant weights: no need for the default double buffer.
            return pl.BlockSpec(shape, idx, pipeline_mode=pl.Buffered(1))
        return pl.BlockSpec(shape, idx)

    inputs = [T.reshape(B * N, D) if flat_t else T, M, mask3, Wa, ba]
    in_specs = [
        (pl.BlockSpec((bb * N, D), lambda b: (b, 0)) if flat_t
         else pl.BlockSpec((bb, N, D), lambda b: (b, 0, 0))),       # T
        pl.BlockSpec((bb, N, D), lambda b: (b, 0, 0)),              # M
        pl.BlockSpec((bb, 1, N), lambda b: (b, 0, 0)),              # mask
        w_spec(tuple(Wa.shape)),                                    # W1 | W1||Wg
        w_spec(tuple(ba.shape)),                                    # b1 | b1||bg
    ]
    if gated and not fused:
        inputs += [Wg.astype(cdtype), bg.reshape(1, A).astype(jnp.float32)]
        in_specs += [w_spec((D, A)), w_spec((1, A))]
    inputs.append(w2r)
    in_specs.append(w_spec((1, A)))

    out_shape = (jax.ShapeDtypeStruct((B, 1, D), jnp.float32),      # z
                 jax.ShapeDtypeStruct((B, 1, N), jnp.float32))      # f (logits)
    out_specs = (pl.BlockSpec((bb, 1, D), lambda b: (b, 0, 0)),
                 pl.BlockSpec((bb, 1, N), lambda b: (b, 0, 0)))

    z3, f3 = pl.pallas_call(
        _make_camil_kernel(gated=gated, fused=fused, flat_t=flat_t,
                           bb=bb, n=N, d=D, a=A),
        out_shape=out_shape,
        grid_spec=pltpu.PrefetchScalarGridSpec(
            num_scalar_prefetch=0,
            grid=grid,
            in_specs=in_specs,
            out_specs=out_specs,
        ),
        compiler_params=pltpu.CompilerParams(
            dimension_semantics=("parallel",),
            vmem_limit_bytes=vmem_limit,
        ),
    )(*inputs)

    return z3[:, 0, :], f3[:, 0, :]


_SINGLE_BUFFER_WEIGHTS = [True]   # flipped off if this jax build rejects Buffered(1)


def camil_attention_pool(T, M, mask=None, params=None, *, gated: bool = False,
                         return_att: bool = False, block_bags: int | None = None):
    """T, M: (B, N, D); mask: (B, N) or None; params: {'W1','b1','Wg','bg','w2'}."""
    assert T.ndim == 3 and T.shape == M.shape
    B, N, _ = T.shape
    if mask is None:
        mask = jnp.ones((B, N), jnp.float32)
    Wg = params.get("Wg") if gated else None
    bg = params.get("bg") if gated else None
    args = (T, M, mask, params["W1"], params["b1"], Wg, bg, params["w2"])
    kw = dict(gated=gated, block_bags=block_bags)

    if _SINGLE_BUFFER_WEIGHTS[0]:
        try:
            z, f = _camil_forward(*args, single_buffer_weights=True, **kw)
        except Exception:
            _SINGLE_BUFFER_WEIGHTS[0] = False
            z, f = _camil_forward(*args, single_buffer_weights=False, **kw)
    else:
        z, f = _camil_forward(*args, single_buffer_weights=False, **kw)

    if return_att:
        return z, f
    return z


# --------------------------------------------------------------------------- #
# Reference + tests
# --------------------------------------------------------------------------- #
def _reference(T, M, mask, params, gated):
    hp = "highest"
    H = jnp.tanh(jnp.einsum("bnd,da->bna", T, params["W1"], precision=hp)
                 + params["b1"])
    if gated:
        H = H * jax.nn.sigmoid(
            jnp.einsum("bnd,da->bna", T, params["Wg"], precision=hp)
            + params["bg"])
    f = jnp.einsum("bna,a->bn", H, params["w2"], precision=hp)
    fm = f if mask is None else jnp.where(mask > 0, f, -1e30)
    a = jax.nn.softmax(fm, axis=1)
    z = jnp.einsum("bnd,bn->bd", M, a, precision=hp)
    return z, f


if __name__ == "__main__":
    configs = [
        # (B,  N,  D,   A,  gated, block_bags)
        (4,  8,  32,  16,  False, None),   # basic, single grid step
        (4,  8,  32,  16,  True,  None),   # gated, non-fused (A % 128 != 0)
        (4,  8,  64, 128,  True,  None),   # gated, fused W1|Wg (A % 128 == 0)
        (16, 8, 128,  16,  False, 4),      # multi-step grid, flat-T path
        (12, 9, 128,  16,  False, 7),      # ragged last step + reshape fallback
    ]

    key = jax.random.PRNGKey(0)
    for idx, (B, N, D, A, gated, bbag) in enumerate(configs):
        key, kT, kM, kW1, kb1, kWg, kbg, kw2, kmsk = jax.random.split(key, 9)
        T = jax.random.normal(kT, (B, N, D), jnp.float32)
        M = jax.random.normal(kM, (B, N, D), jnp.float32)
        mask = (jax.random.uniform(kmsk, (B, N)) > 0.25).astype(jnp.float32)
        mask = mask.at[:, 0].set(1.0)      # keep every bag non-empty
        params = {
            "W1": 0.1 * jax.random.normal(kW1, (D, A), jnp.float32),
            "b1": 0.1 * jax.random.normal(kb1, (A,), jnp.float32),
            "Wg": 0.1 * jax.random.normal(kWg, (D, A), jnp.float32),
            "bg": 0.1 * jax.random.normal(kbg, (A,), jnp.float32),
            "w2": 0.1 * jax.random.normal(kw2, (A,), jnp.float32),
        }

        # --- f32 inputs: tight comparison against the f32 reference ----------
        z, f = camil_attention_pool(T, M, mask, params, gated=gated,
                                    return_att=True, block_bags=bbag)
        jax.block_until_ready((z, f))
        z_ref, f_ref = _reference(T, M, mask, params, gated)
        assert z.shape == (B, D) and f.shape == (B, N)
        assert jnp.allclose(z, z_ref, atol=3e-5, rtol=3e-5), f"z mismatch f32 cfg{idx}"
        assert jnp.allclose(f, f_ref, atol=3e-5, rtol=3e-5), f"f mismatch f32 cfg{idx}"

        # --- bf16 inputs (caller-chosen precision; no wrapper cast of T/M) ---
        Tb, Mb = T.astype(jnp.bfloat16), M.astype(jnp.bfloat16)
        pq = {k: (v.astype(jnp.bfloat16).astype(jnp.float32)
                  if k in ("W1", "Wg") else v) for k, v in params.items()}
        zb, fb = camil_attention_pool(Tb, Mb, mask, params, gated=gated,
                                      return_att=True, block_bags=bbag)
        jax.block_until_ready((zb, fb))
        zq_ref, fq_ref = _reference(Tb.astype(jnp.float32),
                                    Mb.astype(jnp.float32), mask, pq, gated)
        assert zb.shape == (B, D) and fb.shape == (B, N)
        assert jnp.allclose(zb, zq_ref, atol=1e-2, rtol=1e-2), f"z mismatch bf16 cfg{idx}"
        assert jnp.allclose(fb, fq_ref, atol=5e-3, rtol=5e-3), f"f mismatch bf16 cfg{idx}"

    print("KERNEL_OK")
</pallas_src>

<mosaic_0001>
module attributes {stable_mosaic.version = 11 : i64} {
  func.func @kernel(%arg0: i32, %arg1: memref<32x32xf32, #tpu.memory_space<vmem>>, %arg2: memref<4x8x32xf32, #tpu.memory_space<vmem>>, %arg3: memref<4x1x8xf32, #tpu.memory_space<vmem>>, %arg4: memref<32x16xf32, #tpu.memory_space<vmem>>, %arg5: memref<1x16xf32, #tpu.memory_space<vmem>>, %arg6: memref<1x16xf32, #tpu.memory_space<vmem>>, %arg7: memref<4x1x32xf32, #tpu.memory_space<vmem>>, %arg8: memref<4x1x8xf32, #tpu.memory_space<vmem>>) attributes {dimension_semantics = [#tpu.dimension_semantics<parallel>], iteration_bounds = array<i64: 1>, scalar_prefetch = 0 : i64, scratch_operands = 0 : i64, tpu.core_type = #tpu.core_type<tc>, window_params = [{transform_indices = @transform_0, window_bounds = array<i64: 32, 32>}, {transform_indices = @transform_1, window_bounds = array<i64: 4, 8, 32>}, {transform_indices = @transform_2, window_bounds = array<i64: 4, 1, 8>}, {pipeline_mode = #tpu.pipeline_mode<synchronous>, transform_indices = @transform_3, window_bounds = array<i64: 32, 16>}, {pipeline_mode = #tpu.pipeline_mode<synchronous>, transform_indices = @transform_4, window_bounds = array<i64: 1, 16>}, {pipeline_mode = #tpu.pipeline_mode<synchronous>, transform_indices = @transform_5, window_bounds = array<i64: 1, 16>}, {transform_indices = @transform_6, window_bounds = array<i64: 4, 1, 32>}, {transform_indices = @transform_7, window_bounds = array<i64: 4, 1, 8>}]} {
    %c0 = arith.constant 0 : index
    %c0_0 = arith.constant 0 : index
    %0 = vector.load %arg1[%c0, %c0_0] : memref<32x32xf32, #tpu.memory_space<vmem>>, vector<32x32xf32>
    %c0_1 = arith.constant 0 : index
    %c0_2 = arith.constant 0 : index
    %1 = vector.load %arg4[%c0_1, %c0_2] : memref<32x16xf32, #tpu.memory_space<vmem>>, vector<32x16xf32>
    %cst = arith.constant dense<0.000000e+00> : vector<32x16xf32>
    %2 = tpu.matmul %0, %1, %cst {dimension_numbers = #tpu.dot_dimension_numbers<[1], [0], [0], [1], [0, 0, 1, 1], [], []>} : vector<32x32xf32>, vector<32x16xf32>, vector<32x16xf32> -> vector<32x16xf32>
    %c0_3 = arith.constant 0 : index
    %c0_4 = arith.constant 0 : index
    %3 = vector.load %arg5[%c0_3, %c0_4] : memref<1x16xf32, #tpu.memory_space<vmem>>, vector<1x16xf32>
    %4 = vector.broadcast %3 : vector<1x16xf32> to vector<32x16xf32>
    %5 = arith.addf %2, %4 : vector<32x16xf32>
    %6 = math.tanh %5 : vector<32x16xf32>
    %c0_5 = arith.constant 0 : index
    %c0_6 = arith.constant 0 : index
    %7 = vector.load %arg6[%c0_5, %c0_6] : memref<1x16xf32, #tpu.memory_space<vmem>>, vector<1x16xf32>
    %8 = vector.broadcast %7 : vector<1x16xf32> to vector<32x16xf32>
    %9 = arith.mulf %6, %8 : vector<32x16xf32>
    %cst_7 = arith.constant dense<0.000000e+00> : vector<32xf32>
    %10 = vector.multi_reduction <add>, %9, %cst_7 [1] : vector<32x16xf32> to vector<32xf32>
    %11 = vector.shape_cast %10 : vector<32xf32> to vector<32x1xf32>
    %12 = vector.shape_cast %11 : vector<32x1xf32> to vector<4x1x8xf32>
    %c0_8 = arith.constant 0 : index
    %c0_9 = arith.constant 0 : index
    %c0_10 = arith.constant 0 : index
    %13 = vector.load %arg8[%c0_8, %c0_9, %c0_10] : memref<4x1x8xf32, #tpu.memory_space<vmem>>, vector<4x1x8xf32>
    tpu.vector_store %arg8[%c0_8, %c0_9, %c0_10], %12 {strides = array<i32>} : memref<4x1x8xf32, #tpu.memory_space<vmem>>, vector<4x1x8xf32>,
    %c0_11 = arith.constant 0 : index
    %c0_12 = arith.constant 0 : index
    %c0_13 = arith.constant 0 : index
    %14 = vector.load %arg3[%c0_11, %c0_12, %c0_13] : memref<4x1x8xf32, #tpu.memory_space<vmem>>, vector<4x1x8xf32>
    %cst_14 = arith.constant 0.000000e+00 : f32
    %15 = vector.broadcast %cst_14 : f32 to vector<4x1x8xf32>
    %16 = arith.cmpf ogt, %14, %15 : vector<4x1x8xf32>
    %cst_15 = arith.constant -1.000000e+30 : f32
    %17 = vector.broadcast %cst_15 : f32 to vector<4x1x8xf32>
    %18 = arith.select %16, %12, %17 : vector<4x1x8xi1>, vector<4x1x8xf32>
    %cst_16 = arith.constant dense<0xFF800000> : vector<4x1xf32>
    %19 = vector.multi_reduction <maximumf>, %18, %cst_16 [2] : vector<4x1x8xf32> to vector<4x1xf32>
    %20 = vector.shape_cast %19 : vector<4x1xf32> to vector<4x1x1xf32>
    %21 = vector.broadcast %20 : vector<4x1x1xf32> to vector<4x1x8xf32>
    %22 = arith.subf %18, %21 : vector<4x1x8xf32>
    %23 = math.exp %22 : vector<4x1x8xf32>
    %cst_17 = arith.constant dense<0.000000e+00> : vector<4x1xf32>
    %24 = vector.multi_reduction <add>, %23, %cst_17 [2] : vector<4x1x8xf32> to vector<4x1xf32>
    %25 = vector.shape_cast %24 : vector<4x1xf32> to vector<4x1x1xf32>
    %c0_18 = arith.constant 0 : index
    %c0_19 = arith.constant 0 : index
    %c0_20 = arith.constant 0 : index
    %26 = vector.load %arg2[%c0_18, %c0_19, %c0_20] : memref<4x8x32xf32, #tpu.memory_space<vmem>>, vector<4x8x32xf32>
    "tpu.trace_start"() <{level = 10 : i32, message = "bqn,bnd->bqd"}> : () -> ()
    %cst_21 = arith.constant dense<0.000000e+00> : vector<4x1x32xf32>
    %27 = tpu.matmul %23, %26, %cst_21 {dimension_numbers = #tpu.dot_dimension_numbers<[2], [1], [1], [2], [0, 0, 0, 1, 1, 2], [0], [0]>} : vector<4x1x8xf32>, vector<4x8x32xf32>, vector<4x1x32xf32> -> vector<4x1x32xf32>
    "tpu.trace_stop"() : () -> ()
    %cst_22 = arith.constant 1.000000e+00 : f32
    %28 = vector.broadcast %cst_22 : f32 to vector<4x1x1xf32>
    %29 = arith.divf %28, %25 : vector<4x1x1xf32>
    %30 = vector.broadcast %29 : vector<4x1x1xf32> to vector<4x1x32xf32>
    %31 = arith.mulf %27, %30 : vector<4x1x32xf32>
    %c0_23 = arith.constant 0 : index
    %c0_24 = arith.constant 0 : index
    %c0_25 = arith.constant 0 : index
    %32 = vector.load %arg7[%c0_23, %c0_24, %c0_25] : memref<4x1x32xf32, #tpu.memory_space<vmem>>, vector<4x1x32xf32>
    tpu.vector_store %arg7[%c0_23, %c0_24, %c0_25], %31 {strides = array<i32>} : memref<4x1x32xf32, #tpu.memory_space<vmem>>, vector<4x1x32xf32>,
    return
  }
  func.func @transform_0(%arg0: i32) -> (i32, i32) {
    %c0_i32 = arith.constant 0 : i32
    %c0_i32_0 = arith.constant 0 : i32
    return %arg0, %c0_i32 : i32, i32
  }
  func.func @transform_1(%arg0: i32) -> (i32, i32, i32) {
    %c0_i32 = arith.constant 0 : i32
    %c0_i32_0 = arith.constant 0 : i32
    %c0_i32_1 = arith.constant 0 : i32
    return %arg0, %c0_i32, %c0_i32_0 : i32, i32, i32
  }
  func.func @transform_2(%arg0: i32) -> (i32, i32, i32) {
    %c0_i32 = arith.constant 0 : i32
    %c0_i32_0 = arith.constant 0 : i32
    %c0_i32_1 = arith.constant 0 : i32
    return %arg0, %c0_i32, %c0_i32_0 : i32, i32, i32
  }
  func.func @transform_3(%arg0: i32) -> (i32, i32) {
    %c0_i32 = arith.constant 0 : i32
    %c0_i32_0 = arith.constant 0 : i32
    %c0_i32_1 = arith.constant 0 : i32
    return %c0_i32, %c0_i32_0 : i32, i32
  }
  func.func @transform_4(%arg0: i32) -> (i32, i32) {
    %c0_i32 = arith.constant 0 : i32
    %c0_i32_0 = arith.constant 0 : i32
    %c0_i32_1 = arith.constant 0 : i32
    return %c0_i32, %c0_i32_0 : i32, i32
  }
  func.func @transform_5(%arg0: i32) -> (i32, i32) {
    %c0_i32 = arith.constant 0 : i32
    %c0_i32_0 = arith.constant 0 : i32
    %c0_i32_1 = arith.constant 0 : i32
    return %c0_i32, %c0_i32_0 : i32, i32
  }
  func.func @transform_6(%arg0: i32) -> (i32, i32, i32) {
    %c0_i32 = arith.constant 0 : i32
    %c0_i32_0 = arith.constant 0 : i32
    %c0_i32_1 = arith.constant 0 : i32
    return %arg0, %c0_i32, %c0_i32_0 : i32, i32, i32
  }
  func.func @transform_7(%arg0: i32) -> (i32, i32, i32) {
    %c0_i32 = arith.constant 0 : i32
    %c0_i32_0 = arith.constant 0 : i32
    %c0_i32_1 = arith.constant 0 : i32
    return %arg0, %c0_i32, %c0_i32_0 : i32, i32, i32
  }
}

module attributes {stable_mosaic.version = 11 : i64} {
  func.func @kernel(%arg0: i32, %arg1: memref<32x32xf32, #tpu.memory_space<vmem>>, %arg2: memref<4x8x32xf32, #tpu.memory_space<vmem>>, %arg3: memref<4x1x8xf32, #tpu.memory_space<vmem>>, %arg4: memref<32x16xf32, #tpu.memory_space<vmem>>, %arg5: memref<1x16xf32, #tpu.memory_space<vmem>>, %arg6: memref<1x16xf32, #tpu.memory_space<vmem>>, %arg7: memref<4x1x32xf32, #tpu.memory_space<vmem>>, %arg8: memref<4x1x8xf32, #tpu.memory_space<vmem>>) attributes {dimension_semantics = [#tpu.dimension_semantics<parallel>], iteration_bounds = array<i64: 1>, scalar_prefetch = 0 : i64, scratch_operands = 0 : i64, tpu.core_type = #tpu.core_type<tc>, window_params = [{transform_indices = @transform_0, window_bounds = array<i64: 32, 32>}, {transform_indices = @transform_1, window_bounds = array<i64: 4, 8, 32>}, {transform_indices = @transform_2, window_bounds = array<i64: 4, 1, 8>}, {pipeline_mode = #tpu.pipeline_mode<synchronous>, transform_indices = @transform_3, window_bounds = array<i64: 32, 16>}, {pipeline_mode = #tpu.pipeline_mode<synchronous>, transform_indices = @transform_4, window_bounds = array<i64: 1, 16>}, {pipeline_mode = #tpu.pipeline_mode<synchronous>, transform_indices = @transform_5, window_bounds = array<i64: 1, 16>}, {transform_indices = @transform_6, window_bounds = array<i64: 4, 1, 32>}, {transform_indices = @transform_7, window_bounds = array<i64: 4, 1, 8>}]} {
    %c0 = arith.constant 0 : index
    %c0_0 = arith.constant 0 : index
    %0 = vector.load %arg1[%c0, %c0_0] : memref<32x32xf32, #tpu.memory_space<vmem>>, vector<32x32xf32>
    %c0_1 = arith.constant 0 : index
    %c0_2 = arith.constant 0 : index
    %1 = vector.load %arg4[%c0_1, %c0_2] : memref<32x16xf32, #tpu.memory_space<vmem>>, vector<32x16xf32>
    %cst = arith.constant dense<0.000000e+00> : vector<32x16xf32>
    %2 = tpu.matmul %0, %1, %cst {dimension_numbers = #tpu.dot_dimension_numbers<[1], [0], [0], [1], [0, 0, 1, 1], [], []>} : vector<32x32xf32>, vector<32x16xf32>, vector<32x16xf32> -> vector<32x16xf32>
    %c0_3 = arith.constant 0 : index
    %c0_4 = arith.constant 0 : index
    %3 = vector.load %arg5[%c0_3, %c0_4] : memref<1x16xf32, #tpu.memory_space<vmem>>, vector<1x16xf32>
    %4 = vector.broadcast %3 : vector<1x16xf32> to vector<32x16xf32>
    %5 = arith.addf %2, %4 : vector<32x16xf32>
    %6 = math.tanh %5 : vector<32x16xf32>
    %c0_5 = arith.constant 0 : index
    %c0_6 = arith.constant 0 : index
    %7 = vector.load %arg6[%c0_5, %c0_6] : memref<1x16xf32, #tpu.memory_space<vmem>>, vector<1x16xf32>
    %8 = vector.broadcast %7 : vector<1x16xf32> to vector<32x16xf32>
    %9 = arith.mulf %6, %8 : vector<32x16xf32>
    %cst_7 = arith.constant dense<0.000000e+00> : vector<32xf32>
    %10 = vector.multi_reduction <add>, %9, %cst_7 [1] : vector<32x16xf32> to vector<32xf32>
    %11 = vector.shape_cast %10 : vector<32xf32> to vector<32x1xf32>
    %12 = vector.shape_cast %11 : vector<32x1xf32> to vector<4x1x8xf32>
    %c0_8 = arith.constant 0 : index
    %c0_9 = arith.constant 0 : index
    %c0_10 = arith.constant 0 : index
    %13 = vector.load %arg8[%c0_8, %c0_9, %c0_10] : memref<4x1x8xf32, #tpu.memory_space<vmem>>, vector<4x1x8xf32>
    tpu.vector_store %arg8[%c0_8, %c0_9, %c0_10], %12 {strides = array<i32>} : memref<4x1x8xf32, #tpu.memory_space<vmem>>, vector<4x1x8xf32>,
    %c0_11 = arith.constant 0 : index
    %c0_12 = arith.constant 0 : index
    %c0_13 = arith.constant 0 : index
    %14 = vector.load %arg3[%c0_11, %c0_12, %c0_13] : memref<4x1x8xf32, #tpu.memory_space<vmem>>, vector<4x1x8xf32>
    %cst_14 = arith.constant 0.000000e+00 : f32
    %15 = vector.broadcast %cst_14 : f32 to vector<4x1x8xf32>
    %16 = arith.cmpf ogt, %14, %15 : vector<4x1x8xf32>
    %cst_15 = arith.constant -1.000000e+30 : f32
    %17 = vector.broadcast %cst_15 : f32 to vector<4x1x8xf32>
    %18 = arith.select %16, %12, %17 : vector<4x1x8xi1>, vector<4x1x8xf32>
    %cst_16 = arith.constant dense<0xFF800000> : vector<4x1xf32>
    %19 = vector.multi_reduction <maximumf>, %18, %cst_16 [2] : vector<4x1x8xf32> to vector<4x1xf32>
    %20 = vector.shape_cast %19 : vector<4x1xf32> to vector<4x1x1xf32>
    %21 = vector.broadcast %20 : vector<4x1x1xf32> to vector<4x1x8xf32>
    %22 = arith.subf %18, %21 : vector<4x1x8xf32>
    %23 = math.exp %22 : vector<4x1x8xf32>
    %cst_17 = arith.constant dense<0.000000e+00> : vector<4x1xf32>
    %24 = vector.multi_reduction <add>, %23, %cst_17 [2] : vector<4x1x8xf32> to vector<4x1xf32>
    %25 = vector.shape_cast %24 : vector<4x1xf32> to vector<4x1x1xf32>
    %c0_18 = arith.constant 0 : index
    %c0_19 = arith.constant 0 : index
    %c0_20 = arith.constant 0 : index
    %26 = vector.load %arg2[%c0_18, %c0_19, %c0_20] : memref<4x8x32xf32, #tpu.memory_space<vmem>>, vector<4x8x32xf32>
    "tpu.trace_start"() <{level = 10 : i32, message = "bqn,bnd->bqd"}> : () -> ()
    %cst_21 = arith.constant dense<0.000000e+00> : vector<4x1x32xf32>
    %27 = tpu.matmul %23, %26, %cst_21 {dimension_numbers = #tpu.dot_dimension_numbers<[2], [1], [1], [2], [0, 0, 0, 1, 1, 2], [0], [0]>} : vector<4x1x8xf32>, vector<4x8x32xf32>, vector<4x1x32xf32> -> vector<4x1x32xf32>
    "tpu.trace_stop"() : () -> ()
    %cst_22 = arith.constant 1.000000e+00 : f32
    %28 = vector.broadcast %cst_22 : f32 to vector<4x1x1xf32>
    %29 = arith.divf %28, %25 : vector<4x1x1xf32>
    %30 = vector.broadcast %29 : vector<4x1x1xf32> to vector<4x1x32xf32>
    %31 = arith.mulf %27, %30 : vector<4x1x32xf32>
    %c0_23 = arith.constant 0 : index
    %c0_24 = arith.constant 0 : index
    %c0_25 = arith.constant 0 : index
    %32 = vector.load %arg7[%c0_23, %c0_24, %c0_25] : memref<4x1x32xf32, #tpu.memory_space<vmem>>, vector<4x1x32xf32>
    tpu.vector_store %arg7[%c0_23, %c0_24, %c0_25], %31 {strides = array<i32>} : memref<4x1x32xf32, #tpu.memory_space<vmem>>, vector<4x1x32xf32>,
    return
  }
  func.func @transform_0(%arg0: i32) -> (i32, i32) {
    %c0_i32 = arith.constant 0 : i32
    %c0_i32_0 = arith.constant 0 : i32
    return %arg0, %c0_i32 : i32, i32
  }
  func.func @transform_1(%arg0: i32) -> (i32, i32, i32) {
    %c0_i32 = arith.constant 0 : i32
    %c0_i32_0 = arith.constant 0 : i32
    %c0_i32_1 = arith.constant 0 : i32
    return %arg0, %c0_i32, %c0_i32_0 : i32, i32, i32
  }
  func.func @transform_2(%arg0: i32) -> (i32, i32, i32) {
    %c0_i32 = arith.constant 0 : i32
    %c0_i32_0 = arith.constant 0 : i32
    %c0_i32_1 = arith.constant 0 : i32
    return %arg0, %c0_i32, %c0_i32_0 : i32, i32, i32
  }
  func.func @transform_3(%arg0: i32) -> (i32, i32) {
    %c0_i32 = arith.constant 0 : i32
    %c0_i32_0 = arith.constant 0 : i32
    %c0_i32_1 = arith.constant 0 : i32
    return %c0_i32, %c0_i32_0 : i32, i32
  }
  func.func @transform_4(%arg0: i32) -> (i32, i32) {
    %c0_i32 = arith.constant 0 : i32
    %c0_i32_0 = arith.constant 0 : i32
    %c0_i32_1 = arith.constant 0 : i32
    return %c0_i32, %c0_i32_0 : i32, i32
  }
  func.func @transform_5(%arg0: i32) -> (i32, i32) {
    %c0_i32 = arith.constant 0 : i32
    %c0_i32_0 = arith.constant 0 : i32
    %c0_i32_1 = arith.constant 0 : i32
    return %c0_i32, %c0_i32_0 : i32, i32
  }
  func.func @transform_6(%arg0: i32) -> (i32, i32, i32) {
    %c0_i32 = arith.constant 0 : i32
    %c0_i32_0 = arith.constant 0 : i32
    %c0_i32_1 = arith.constant 0 : i32
    return %arg0, %c0_i32, %c0_i32_0 : i32, i32, i32
  }
  func.func @transform_7(%arg0: i32) -> (i32, i32, i32) {
    %c0_i32 = arith.constant 0 : i32
    %c0_i32_0 = arith.constant 0 : i32
    %c0_i32_1 = arith.constant 0 : i32
    return %arg0, %c0_i32, %c0_i32_0 : i32, i32, i32
  }
}

</mosaic_0001>

<llo_original>
// kernel: _camil_forward.1
$region0: #{_camil_forward.1}
  #allocation0 [shape = 'u32[]', space=smem, size = 0x4, offset = 0x4, fixed_abs, tag = 'smem constant byte address 0x4 - core index']
  #allocation1 [shape = 'u32[144,128]{1,0:T(1,128)}', space=vmem, size = 0x12000, scoped, tag = 'internal scratch']
  %s0 = inlined_call_operand.vmem [shape: f32[32,32], index: 0, kind: input, shape index: {}]
  %s1 = inlined_call_operand.hbm [shape: f32[4,8,32], index: 1, kind: input, shape index: {}]
  %s2 = inlined_call_operand.vmem [shape: f32[4,1,8], index: 2, kind: input, shape index: {}]
  %s3 = inlined_call_operand.vmem [shape: f32[32,16], index: 3, kind: input, shape index: {}]
  %s4 = inlined_call_operand.vmem [shape: f32[1,16], index: 4, kind: input, shape index: {}]
  %s5 = inlined_call_operand.vmem [shape: f32[1,16], index: 5, kind: input, shape index: {}]
  %s6 = inlined_call_operand.hbm [shape: f32[4,1,32], index: 6, kind: output, shape index: {0}]
  %s7 = inlined_call_operand.hbm [shape: f32[4,1,8], index: 7, kind: output, shape index: {1}]
  %8 = xla_tuple %s6, %s7
  %s9 = sld [smem:[#allocation0]]
  $region46: #{_camil_forward.1} parent=0
    _
  %s11 = ssub.s32 1, %s9
  %s12 = scalar_select 0, %s11, %s9
  $region1: #{_camil_forward.1} parent=0
    #allocation2 [shape = 'u8[16384]{0}', space=vmem, size = 0x4000, scoped, tag = 'input window, operand 1, single buffered']
    #allocation3 [shape = 's32[1]{0}', space=sflag, size = 0x4, scoped, tag = 'scoped memory for _camil_forward.1']
    #allocation4 [shape = 's32[1]{0}', space=sflag, size = 0x4, scoped, tag = 'scoped memory for _camil_forward.1']
    #allocation5 [shape = 'u8[2048]{0}', space=vmem, size = 0x800, scoped, tag = 'output window, operand 0, single buffered']
    #allocation6 [shape = 'u8[2048]{0}', space=vmem, size = 0x800, scoped, tag = 'output window, operand 1, single buffered']
    #allocation7 [shape = 's32[1]{0}', space=sflag, size = 0x4, scoped, tag = 'scoped memory for _camil_forward.1']
    %13 = vsyncpa [#allocation3], 0
    %14 = vsyncpa [#allocation4], 0
    %15 = vsyncpa [#allocation7], 0
    // Predicated region
    $region2: #{_camil_forward.1} parent=1 // pred_check
      _
    $region3: #{_camil_forward.1} parent=1 // pred_check_branch
      %17 = sbr.rel (0) target = $region5
    $region4: #{_camil_forward.1} parent=1 // pred_region
      _
    $region5: #{_camil_forward.1} parent=1 // pred_fallthru
      _
    // Predicated region
    $region6: #{_camil_forward.1} parent=1 // pred_check
      _
    $region7: #{_camil_forward.1} parent=1 // pred_check_branch
      %19 = sbr.rel (0) target = $region9
    $region8: #{_camil_forward.1} parent=1 // pred_region
      %s21 = ssub.s32 512, 512
      %22 = vsyncadd [#allocation3], %s21
      %s23 = sshll.u32 [#allocation2], 4
      %s24 = int_to_ptr.vmem [resolvable:$true] %s23
      %29 = dma.hbm_to_vmem [thread:$0]  %s1, 512, %s24, [#allocation3], 128, 128, 8
    $region9: #{_camil_forward.1} parent=1 // pred_fallthru
      _
    // Predicated region
    $region10: #{_camil_forward.1} parent=1 // pred_check
      _
    $region11: #{_camil_forward.1} parent=1 // pred_check_branch
      %31 = sbr.rel (0) target = $region13
    $region12: #{_camil_forward.1} parent=1 // pred_region
      _
    $region13: #{_camil_forward.1} parent=1 // pred_fallthru
      _
    // Predicated region
    $region14: #{_camil_forward.1} parent=1 // pred_check
      _
    $region15: #{_camil_forward.1} parent=1 // pred_check_branch
      %33 = sbr.rel (0) target = $region17
    $region16: #{_camil_forward.1} parent=1 // pred_region
      _
    $region17: #{_camil_forward.1} parent=1 // pred_fallthru
      _
    // Predicated region
    $region18: #{_camil_forward.1} parent=1 // pred_check
      _
    $region19: #{_camil_forward.1} parent=1 // pred_check_branch
      %35 = sbr.rel (0) target = $region21
    $region20: #{_camil_forward.1} parent=1 // pred_region
      _
    $region21: #{_camil_forward.1} parent=1 // pred_fallthru
      _
    // Predicated region
    $region22: #{_camil_forward.1} parent=1 // pred_check
      _
    $region23: #{_camil_forward.1} parent=1 // pred_check_branch
      %37 = sbr.rel (0) target = $region25
    $region24: #{_camil_forward.1} parent=1 // pred_region
      _
    $region25: #{_camil_forward.1} parent=1 // pred_fallthru
      _
    // Predicated region
    $region26: #{_camil_forward.1} parent=1 // pred_check
      _
    $region27: #{_camil_forward.1} parent=1 // pred_check_branch
      %39 = sbr.rel (0) target = $region29
    $region28: #{_camil_forward.1} parent=1 // pred_region
      %40 = dma.done [#allocation3], 512
    $region29: #{_camil_forward.1} parent=1 // pred_fallthru
      _
    %v41 = vld [vmem:[%s0] sm:$0xff]
    %v42 = vld [vmem:[%s0 + $0x8] sm:$0xff]
    %v43 = vld [vmem:[%s0 + $0x10] sm:$0xff]
    %v44 = vld [vmem:[%s0 + $0x18] sm:$0xff]
    %v45 = vld [vmem:[%s3] sm:$0xff]
    %v46 = vld [vmem:[%s3 + $0x8] sm:$0xff]
    %v47 = vld [vmem:[%s3 + $0x10] sm:$0xff]
    %v48 = vld [vmem:[%s3 + $0x18] sm:$0xff]
    %v49 = vld [vmem:[%s4] sm:$0x1]
    %v51 = vlaneseq
    %v52 = vshrl.u32 %v51, 7
    %v53 = vsub.s32 0, %v52
    %v54 = vrot.slane %v49, %v53
    %vm56 = vcmask 261120
    %v58 = vsel %vm56, %v41, 0
    %v61 = vsel %vm56, %v42, 0
    %v64 = vsel %vm56, %v43, 0
    %v67 = vsel %vm56, %v44, 0
    %69 = vmatprep.subr.mxu0 0.0
    %70 = vmatpush1.msra.mxu0 0.0
    %71 = vmatprep.subr.mxu0 0.0
    %72 = vmatpush1.msra.mxu0 0.0
    %73 = vmatprep.subr.mxu0 0.0
    %74 = vmatpush1.msra.mxu0 0.0
    %75 = vmatprep.subr.mxu0 0.0
    %76 = vmatpush1.msra.mxu0 0.0
    %77 = vmatprep.subr.mxu0 0.0
    %78 = vmatpush1.msra.mxu0 0.0
    %79 = vmatprep.subr.mxu0 0.0
    %80 = vmatpush1.msra.mxu0 0.0
    %81 = vmatprep.subr.mxu0 0.0
    %82 = vmatpush1.msra.mxu0 0.0
    %83 = vmatprep.subr.mxu0 0.0
    %84 = vmatpush1.msra.mxu0 0.0
    %85 = vmatprep.subr.mxu0 0.0
    %86 = vmatpush1.msra.mxu0 0.0
    %87 = vmatprep.subr.mxu0 0.0
    %88 = vmatpush1.msra.mxu0 0.0
    %89 = vmatprep.subr.mxu0 0.0
    %90 = vmatpush1.msra.mxu0 0.0
    %91 = vmatprep.subr.mxu0 0.0
    %92 = vmatpush1.msra.mxu0 0.0
    %93 = vmatprep.subr.mxu0 0.0
    %94 = vmatpush1.msra.mxu0 %v48
    %95 = vmatprep.subr.mxu0 0.0
    %96 = vmatpush1.msra.mxu0 %v47
    %97 = vmatprep.subr.mxu0 0.0
    %98 = vmatpush1.msra.mxu0 %v46
    %99 = vmatprep.subr.mxu0 0.0
    %100 = vmatpush1.msra.mxu0 %v45
    %101 = vmatprep.subr.mxu0 0.0
    %102 = vmatpush2.msra.mxu0 0.0
    %103 = vmatprep.subr.mxu0 0.0
    %104 = vmatpush2.msra.mxu0 0.0
    %105 = vmatprep.subr.mxu0 0.0
    %106 = vmatpush2.msra.mxu0 0.0
    %107 = vmatprep.subr.mxu0 0.0
    %108 = vmatpush2.msra.mxu0 0.0
    %109 = vmatprep.subr.mxu0 0.0
    %110 = vmatpush2.msra.mxu0 0.0
    %111 = vmatprep.subr.mxu0 0.0
    %112 = vmatpush2.msra.mxu0 0.0
    %113 = vmatprep.subr.mxu0 0.0
    %114 = vmatpush2.msra.mxu0 0.0
    %115 = vmatprep.subr.mxu0 0.0
    %116 = vmatpush2.msra.mxu0 0.0
    %117 = vmatprep.subr.mxu0 0.0
    %118 = vmatpush2.msra.mxu0 0.0
    %119 = vmatprep.subr.mxu0 0.0
    %120 = vmatpush2.msra.mxu0 0.0
    %121 = vmatprep.subr.mxu0 0.0
    %122 = vmatpush2.msra.mxu0 0.0
    %123 = vmatprep.subr.mxu0 0.0
    %124 = vmatpush2.msra.mxu0 0.0
    %125 = vmatprep.subr.mxu0 0.0
    %126 = vmatpush2.msra.mxu0 0.0
    %127 = vmatprep.subr.mxu0 0.0
    %128 = vmatpush2.msra.mxu0 0.0
    %129 = vmatprep.subr.mxu0 0.0
    %130 = vmatpush2.msra.mxu0 0.0
    %131 = vmatprep.subr.mxu0 0.0
    %132 = vmatpush2.msra.mxu0 0.0
    %133 = vmatprep.mubr.f32.mxu0 0.0
    %134 = vmatmul.mubr.f32.gmra.mxu0 %v58
    %v135 = vpop.f32.mrf.mxu0
    %v136 = vadd.f32 %v54, %v135
    %v137 = vpop.f32.mrf.mxu0
    %138 = vmatprep.mubr.f32.mxu0 0.0
    %139 = vmatmul.mubr.f32.gmra.mxu0 %v61
    %v140 = vpop.f32.mrf.mxu0
    %v141 = vadd.f32 %v54, %v140
    %v142 = vpop.f32.mrf.mxu0
    %143 = vmatprep.mubr.f32.mxu0 0.0
    %144 = vmatmul.mubr.f32.gmra.mxu0 %v64
    %v145 = vpop.f32.mrf.mxu0
    %v146 = vadd.f32 %v54, %v145
    %v147 = vpop.f32.mrf.mxu0
    %148 = vmatprep.mubr.f32.mxu0 0.0
    %149 = vmatmul.mubr.f32.gmra.mxu0 %v67
    %v150 = vpop.f32.mrf.mxu0
    %v151 = vadd.f32 %v54, %v150
    %v152 = vpop.f32.mrf.mxu0
    %153 = vdwg.mxu0
    %v154 = vtanh.pop %v136
    %v155 = vtanh.pop %v141
    %v156 = vtanh.pop %v146
    %v157 = vtanh.pop %v151
    %v158 = vld [vmem:[%s5] sm:$0x1]
    %v160 = vlaneseq
    %v161 = vshrl.u32 %v160, 7
    %v162 = vsub.s32 0, %v161
    %v163 = vrot.slane %v158, %v162
    %v165 = vmul.f32 %v154, %v163
    %v166 = vmul.f32 %v155, %v163
    %v167 = vmul.f32 %v156, %v163
    %v168 = vmul.f32 %v157, %v163
    %vm169 = vcmask 130048
    %v170 = vsel %vm169, %v165, 0.0
    %171 = vadd.xlane.f32.xlu0 %v170
    %v172 = vpop.xlane.xlu0 %171
    %v173 = vsel %vm169, %v166, 0.0
    %174 = vadd.xlane.f32.xlu0 %v173
    %v175 = vpop.xlane.xlu0 %174
    %v176 = vsel %vm169, %v167, 0.0
    %177 = vadd.xlane.f32.xlu0 %v176
    %v178 = vpop.xlane.xlu0 %177
    %v179 = vsel %vm169, %v168, 0.0
    %180 = vadd.xlane.f32.xlu0 %v179
    %v181 = vpop.xlane.xlu0 %180
    %v186 = vlaneseq
    %v187 = vand.u32 %v186, 127
    %v188 = vlaneseq
    %v189 = vshrl.u32 %v188, 7
    %v190 = vsub.s32 %v187, %v189
    %v191 = vrot.slane %v172, %v190
    %v192 = vlaneseq
    %v193 = vshrl.u32 %v192, 7
    %v194 = vsub.s32 %v187, %v193
    %v195 = vrot.slane %v175, %v194
    %v196 = vlaneseq
    %v197 = vshrl.u32 %v196, 7
    %v198 = vsub.s32 %v187, %v197
    %v199 = vrot.slane %v178, %v198
    %v200 = vlaneseq
    %v201 = vshrl.u32 %v200, 7
    %v202 = vsub.s32 %v187, %v201
    %v203 = vrot.slane %v181, %v202
    %vm208 = vcmask 57344
    %209 = vst.msk [vmem:[#allocation6] sm:$0x1] %vm208, %v191
    %210 = vst.msk [vmem:[#allocation6 + $0x1] sm:$0x1] %vm208, %v195
    %211 = vst.msk [vmem:[#allocation6 + $0x2] sm:$0x1] %vm208, %v199
    %212 = vst.msk [vmem:[#allocation6 + $0x3] sm:$0x1] %vm208, %v203
    %v213 = vld [vmem:[%s2] sm:$0x1]
    %v214 = vld [vmem:[%s2 + $0x1] sm:$0x1]
    %v215 = vld [vmem:[%s2 + $0x2] sm:$0x1]
    %v216 = vld [vmem:[%s2 + $0x3] sm:$0x1]
    %vm217 = vcmp.gt.f32.partialorder %v213, 0.0
    %vm218 = vcmp.gt.f32.partialorder %v214, 0.0
    %vm219 = vcmp.gt.f32.partialorder %v215, 0.0
    %vm220 = vcmp.gt.f32.partialorder %v216, 0.0
    %v221 = vlaneseq
    %v222 = vshrl.u32 %v221, 7
    %v223 = vsub.s32 0, %v222
    %v224 = vrot.slane %v172, %v223
    %v225 = vlaneseq
    %v226 = vshrl.u32 %v225, 7
    %v227 = vsub.s32 1, %v226
    %v228 = vrot.slane %v172, %v227
    %v229 = vlaneseq
    %v230 = vshrl.u32 %v229, 7
    %v231 = vsub.s32 2, %v230
    %v232 = vrot.slane %v172, %v231
    %v233 = vlaneseq
    %v234 = vshrl.u32 %v233, 7
    %v235 = vsub.s32 3, %v234
    %v236 = vrot.slane %v172, %v235
    %v237 = vlaneseq
    %v238 = vshrl.u32 %v237, 7
    %v239 = vsub.s32 4, %v238
    %v240 = vrot.slane %v172, %v239
    %v241 = vlaneseq
    %v242 = vshrl.u32 %v241, 7
    %v243 = vsub.s32 5, %v242
    %v244 = vrot.slane %v172, %v243
    %v245 = vlaneseq
    %v246 = vshrl.u32 %v245, 7
    %v247 = vsub.s32 6, %v246
    %v248 = vrot.slane %v172, %v247
    %v249 = vlaneseq
    %v250 = vshrl.u32 %v249, 7
    %v251 = vsub.s32 7, %v250
    %v252 = vrot.slane %v172, %v251
    %v253 = vlaneseq
    %v254 = vshrl.u32 %v253, 7
    %v255 = vsub.s32 0, %v254
    %v256 = vrot.slane %v175, %v255
    %v257 = vlaneseq
    %v258 = vshrl.u32 %v257, 7
    %v259 = vsub.s32 1, %v258
    %v260 = vrot.slane %v175, %v259
    %v261 = vlaneseq
    %v262 = vshrl.u32 %v261, 7
    %v263 = vsub.s32 2, %v262
    %v264 = vrot.slane %v175, %v263
    %v265 = vlaneseq
    %v266 = vshrl.u32 %v265, 7
    %v267 = vsub.s32 3, %v266
    %v268 = vrot.slane %v175, %v267
    %v269 = vlaneseq
    %v270 = vshrl.u32 %v269, 7
    %v271 = vsub.s32 4, %v270
    %v272 = vrot.slane %v175, %v271
    %v273 = vlaneseq
    %v274 = vshrl.u32 %v273, 7
    %v275 = vsub.s32 5, %v274
    %v276 = vrot.slane %v175, %v275
    %v277 = vlaneseq
    %v278 = vshrl.u32 %v277, 7
    %v279 = vsub.s32 6, %v278
    %v280 = vrot.slane %v175, %v279
    %v281 = vlaneseq
    %v282 = vshrl.u32 %v281, 7
    %v283 = vsub.s32 7, %v282
    %v284 = vrot.slane %v175, %v283
    %v285 = vlaneseq
    %v286 = vshrl.u32 %v285, 7
    %v287 = vsub.s32 0, %v286
    %v288 = vrot.slane %v178, %v287
    %v289 = vlaneseq
    %v290 = vshrl.u32 %v289, 7
    %v291 = vsub.s32 1, %v290
    %v292 = vrot.slane %v178, %v291
    %v293 = vlaneseq
    %v294 = vshrl.u32 %v293, 7
    %v295 = vsub.s32 2, %v294
    %v296 = vrot.slane %v178, %v295
    %v297 = vlaneseq
    %v298 = vshrl.u32 %v297, 7
    %v299 = vsub.s32 3, %v298
    %v300 = vrot.slane %v178, %v299
    %v301 = vlaneseq
    %v302 = vshrl.u32 %v301, 7
    %v303 = vsub.s32 4, %v302
    %v304 = vrot.slane %v178, %v303
    %v305 = vlaneseq
    %v306 = vshrl.u32 %v305, 7
    %v307 = vsub.s32 5, %v306
    %v308 = vrot.slane %v178, %v307
    %v309 = vlaneseq
    %v310 = vshrl.u32 %v309, 7
    %v311 = vsub.s32 6, %v310
    %v312 = vrot.slane %v178, %v311
    %v313 = vlaneseq
    %v314 = vshrl.u32 %v313, 7
    %v315 = vsub.s32 7, %v314
    %v316 = vrot.slane %v178, %v315
    %v317 = vlaneseq
    %v318 = vshrl.u32 %v317, 7
    %v319 = vsub.s32 0, %v318
    %v320 = vrot.slane %v181, %v319
    %v321 = vlaneseq
    %v322 = vshrl.u32 %v321, 7
    %v323 = vsub.s32 1, %v322
    %v324 = vrot.slane %v181, %v323
    %v325 = vlaneseq
    %v326 = vshrl.u32 %v325, 7
    %v327 = vsub.s32 2, %v326
    %v328 = vrot.slane %v181, %v327
    %v329 = vlaneseq
    %v330 = vshrl.u32 %v329, 7
    %v331 = vsub.s32 3, %v330
    %v332 = vrot.slane %v181, %v331
    %v333 = vlaneseq
    %v334 = vshrl.u32 %v333, 7
    %v335 = vsub.s32 4, %v334
    %v336 = vrot.slane %v181, %v335
    %v337 = vlaneseq
    %v338 = vshrl.u32 %v337, 7
    %v339 = vsub.s32 5, %v338
    %v340 = vrot.slane %v181, %v339
    %v341 = vlaneseq
    %v342 = vshrl.u32 %v341, 7
    %v343 = vsub.s32 6, %v342
    %v344 = vrot.slane %v181, %v343
    %v345 = vlaneseq
    %v346 = vshrl.u32 %v345, 7
    %v347 = vsub.s32 7, %v346
    %v348 = vrot.slane %v181, %v347
    %v349 = vcombine.low %v224, %v228
    %v350 = vcombine.low %v232, %v236
    %v351 = vcombine.low %v240, %v244
    %v352 = vcombine.low %v248, %v252
    %v354 = vunpack.c.l.s4 1966171168
    %v355 = vunpack.c.0.s8 %v354
    %v356 = vlaneseq
    %v357 = vshrl.u32 %v356, 7
    %v358 = vsub.s32 %v355, %v357
    %v359 = vrot.slane %v349, %v358
    %v361 = vunpack.c.l.s4 1966171168
    %v362 = vunpack.c.0.s8 %v361
    %v363 = vlaneseq
    %v364 = vshrl.u32 %v363, 7
    %v365 = vsub.s32 %v362, %v364
    %v366 = vrot.slane %v350, %v365
    %v368 = vunpack.c.l.s4 1966171168
    %v369 = vunpack.c.0.s8 %v368
    %v370 = vlaneseq
    %v371 = vshrl.u32 %v370, 7
    %v372 = vsub.s32 %v369, %v371
    %v373 = vrot.slane %v351, %v372
    %v375 = vunpack.c.l.s4 1966171168
    %v376 = vunpack.c.0.s8 %v375
    %v377 = vlaneseq
    %v378 = vshrl.u32 %v377, 7
    %v379 = vsub.s32 %v376, %v378
    %v380 = vrot.slane %v352, %v379
    %v381 = vcombine.low %v359, %v366
    %v382 = vcombine.low %v373, %v380
    %v384 = vunpack.c.l.s4 1966171168
    %v385 = vunpack.c.0.s8 %v384
    %v386 = vlaneseq
    %v387 = vshrl.u32 %v386, 7
    %v388 = vsub.s32 %v385, %v387
    %v389 = vrot.slane %v381, %v388
    %v391 = vunpack.c.l.s4 1966171168
    %v392 = vunpack.c.0.s8 %v391
    %v393 = vlaneseq
    %v394 = vshrl.u32 %v393, 7
    %v395 = vsub.s32 %v392, %v394
    %v396 = vrot.slane %v382, %v395
    %v397 = vcombine.low %v389, %v396
    %v398 = vcombine.low %v256, %v260
    %v399 = vcombine.low %v264, %v268
    %v400 = vcombine.low %v272, %v276
    %v401 = vcombine.low %v280, %v284
    %v403 = vunpack.c.l.s4 1966171168
    %v404 = vunpack.c.0.s8 %v403
    %v405 = vlaneseq
    %v406 = vshrl.u32 %v405, 7
    %v407 = vsub.s32 %v404, %v406
    %v408 = vrot.slane %v398, %v407
    %v410 = vunpack.c.l.s4 1966171168
    %v411 = vunpack.c.0.s8 %v410
    %v412 = vlaneseq
    %v413 = vshrl.u32 %v412, 7
    %v414 = vsub.s32 %v411, %v413
    %v415 = vrot.slane %v399, %v414
    %v417 = vunpack.c.l.s4 1966171168
    %v418 = vunpack.c.0.s8 %v417
    %v419 = vlaneseq
    %v420 = vshrl.u32 %v419, 7
    %v421 = vsub.s32 %v418, %v420
    %v422 = vrot.slane %v400, %v421
    %v424 = vunpack.c.l.s4 1966171168
    %v425 = vunpack.c.0.s8 %v424
    %v426 = vlaneseq
    %v427 = vshrl.u32 %v426, 7
    %v428 = vsub.s32 %v425, %v427
    %v429 = vrot.slane %v401, %v428
    %v430 = vcombine.low %v408, %v415
    %v431 = vcombine.low %v422, %v429
    %v433 = vunpack.c.l.s4 1966171168
    %v434 = vunpack.c.0.s8 %v433
    %v435 = vlaneseq
    %v436 = vshrl.u32 %v435, 7
    %v437 = vsub.s32 %v434, %v436
    %v438 = vrot.slane %v430, %v437
    %v440 = vunpack.c.l.s4 1966171168
    %v441 = vunpack.c.0.s8 %v440
    %v442 = vlaneseq
    %v443 = vshrl.u32 %v442, 7
    %v444 = vsub.s32 %v441, %v443
    %v445 = vrot.slane %v431, %v444
    %v446 = vcombine.low %v438, %v445
    %v447 = vcombine.low %v288, %v292
    %v448 = vcombine.low %v296, %v300
    %v449 = vcombine.low %v304, %v308
    %v450 = vcombine.low %v312, %v316
    %v452 = vunpack.c.l.s4 1966171168
    %v453 = vunpack.c.0.s8 %v452
    %v454 = vlaneseq
    %v455 = vshrl.u32 %v454, 7
    %v456 = vsub.s32 %v453, %v455
    %v457 = vrot.slane %v447, %v456
    %v459 = vunpack.c.l.s4 1966171168
    %v460 = vunpack.c.0.s8 %v459
    %v461 = vlaneseq
    %v462 = vshrl.u32 %v461, 7
    %v463 = vsub.s32 %v460, %v462
    %v464 = vrot.slane %v448, %v463
    %v466 = vunpack.c.l.s4 1966171168
    %v467 = vunpack.c.0.s8 %v466
    %v468 = vlaneseq
    %v469 = vshrl.u32 %v468, 7
    %v470 = vsub.s32 %v467, %v469
    %v471 = vrot.slane %v449, %v470
    %v473 = vunpack.c.l.s4 1966171168
    %v474 = vunpack.c.0.s8 %v473
    %v475 = vlaneseq
    %v476 = vshrl.u32 %v475, 7
    %v477 = vsub.s32 %v474, %v476
    %v478 = vrot.slane %v450, %v477
    %v479 = vcombine.low %v457, %v464
    %v480 = vcombine.low %v471, %v478
    %v482 = vunpack.c.l.s4 1966171168
    %v483 = vunpack.c.0.s8 %v482
    %v484 = vlaneseq
    %v485 = vshrl.u32 %v484, 7
    %v486 = vsub.s32 %v483, %v485
    %v487 = vrot.slane %v479, %v486
    %v489 = vunpack.c.l.s4 1966171168
    %v490 = vunpack.c.0.s8 %v489
    %v491 = vlaneseq
    %v492 = vshrl.u32 %v491, 7
    %v493 = vsub.s32 %v490, %v492
    %v494 = vrot.slane %v480, %v493
    %v495 = vcombine.low %v487, %v494
    %v496 = vcombine.low %v320, %v324
    %v497 = vcombine.low %v328, %v332
    %v498 = vcombine.low %v336, %v340
    %v499 = vcombine.low %v344, %v348
    %v501 = vunpack.c.l.s4 1966171168
    %v502 = vunpack.c.0.s8 %v501
    %v503 = vlaneseq
    %v504 = vshrl.u32 %v503, 7
    %v505 = vsub.s32 %v502, %v504
    %v506 = vrot.slane %v496, %v505
    %v508 = vunpack.c.l.s4 1966171168
    %v509 = vunpack.c.0.s8 %v508
    %v510 = vlaneseq
    %v511 = vshrl.u32 %v510, 7
    %v512 = vsub.s32 %v509, %v511
    %v513 = vrot.slane %v497, %v512
    %v515 = vunpack.c.l.s4 1966171168
    %v516 = vunpack.c.0.s8 %v515
    %v517 = vlaneseq
    %v518 = vshrl.u32 %v517, 7
    %v519 = vsub.s32 %v516, %v518
    %v520 = vrot.slane %v498, %v519
    %v522 = vunpack.c.l.s4 1966171168
    %v523 = vunpack.c.0.s8 %v522
    %v524 = vlaneseq
    %v525 = vshrl.u32 %v524, 7
    %v526 = vsub.s32 %v523, %v525
    %v527 = vrot.slane %v499, %v526
    %v528 = vcombine.low %v506, %v513
    %v529 = vcombine.low %v520, %v527
    %v531 = vunpack.c.l.s4 1966171168
    %v532 = vunpack.c.0.s8 %v531
    %v533 = vlaneseq
    %v534 = vshrl.u32 %v533, 7
    %v535 = vsub.s32 %v532, %v534
    %v536 = vrot.slane %v528, %v535
    %v538 = vunpack.c.l.s4 1966171168
    %v539 = vunpack.c.0.s8 %v538
    %v540 = vlaneseq
    %v541 = vshrl.u32 %v540, 7
    %v542 = vsub.s32 %v539, %v541
    %v543 = vrot.slane %v529, %v542
    %v544 = vcombine.low %v536, %v543
    %545 = vset.pattern.permute.xlu0 0
    %546 = vperm.xlu0 %545, %v397
    %v547 = vpop.permute.xlu0 %546
    %548 = vset.pattern.permute.xlu0 0
    %549 = vperm.xlu0 %548, %v446
    %v550 = vpop.permute.xlu0 %549
    %551 = vset.pattern.permute.xlu0 0
    %552 = vperm.xlu0 %551, %v495
    %v553 = vpop.permute.xlu0 %552
    %554 = vset.pattern.permute.xlu0 0
    %555 = vperm.xlu0 %554, %v544
    %v556 = vpop.permute.xlu0 %555
    %v557 = vlaneseq
    %v558 = vshrl.u32 %v557, 7
    %v559 = vsub.s32 %v187, %v558
    %v560 = vrot.slane %v547, %v559
    %v561 = vlaneseq
    %v562 = vshrl.u32 %v561, 7
    %v563 = vsub.s32 %v187, %v562
    %v564 = vrot.slane %v550, %v563
    %v565 = vlaneseq
    %v566 = vshrl.u32 %v565, 7
    %v567 = vsub.s32 %v187, %v566
    %v568 = vrot.slane %v553, %v567
    %v569 = vlaneseq
    %v570 = vshrl.u32 %v569, 7
    %v571 = vsub.s32 %v187, %v570
    %v572 = vrot.slane %v556, %v571
    %v574 = vunpack.c.l.s4 1966171168
    %v575 = vunpack.c.0.s8 %v574
    %v576 = vlaneseq
    %v577 = vshrl.u32 %v576, 7
    %v578 = vsub.s32 %v575, %v577
    %v579 = vrot.slane %v560, %v578
    %v581 = vunpack.c.l.s4 1966171168
    %v582 = vunpack.c.0.s8 %v581
    %v583 = vlaneseq
    %v584 = vshrl.u32 %v583, 7
    %v585 = vsub.s32 %v582, %v584
    %v586 = vrot.slane %v579, %v585
    %v588 = vunpack.c.l.s4 1966171168
    %v589 = vunpack.c.0.s8 %v588
    %v590 = vlaneseq
    %v591 = vshrl.u32 %v590, 7
    %v592 = vsub.s32 %v589, %v591
    %v593 = vrot.slane %v564, %v592
    %v595 = vunpack.c.l.s4 1966171168
    %v596 = vunpack.c.0.s8 %v595
    %v597 = vlaneseq
    %v598 = vshrl.u32 %v597, 7
    %v599 = vsub.s32 %v596, %v598
    %v600 = vrot.slane %v593, %v599
    %v602 = vunpack.c.l.s4 1966171168
    %v603 = vunpack.c.0.s8 %v602
    %v604 = vlaneseq
    %v605 = vshrl.u32 %v604, 7
    %v606 = vsub.s32 %v603, %v605
    %v607 = vrot.slane %v568, %v606
    %v609 = vunpack.c.l.s4 1966171168
    %v610 = vunpack.c.0.s8 %v609
    %v611 = vlaneseq
    %v612 = vshrl.u32 %v611, 7
    %v613 = vsub.s32 %v610, %v612
    %v614 = vrot.slane %v607, %v613
    %v616 = vunpack.c.l.s4 1966171168
    %v617 = vunpack.c.0.s8 %v616
    %v618 = vlaneseq
    %v619 = vshrl.u32 %v618, 7
    %v620 = vsub.s32 %v617, %v619
    %v621 = vrot.slane %v572, %v620
    %v623 = vunpack.c.l.s4 1966171168
    %v624 = vunpack.c.0.s8 %v623
    %v625 = vlaneseq
    %v626 = vshrl.u32 %v625, 7
    %v627 = vsub.s32 %v624, %v626
    %v628 = vrot.slane %v621, %v627
    %v633 = vsel %vm217, %v586, -1e+30
    %v634 = vsel %vm218, %v600, -1e+30
    %v635 = vsel %vm219, %v614, -1e+30
    %v636 = vsel %vm220, %v628, -1e+30
    %v637 = vsel %vm208, %v633, -inf
    %638 = vmax.xlane.f32.xlu0 %v637
    %v639 = vpop.xlane.xlu0 %638
    %v640 = vsel %vm208, %v634, -inf
    %641 = vmax.xlane.f32.xlu0 %v640
    %v642 = vpop.xlane.xlu0 %641
    %v643 = vsel %vm208, %v635, -inf
    %644 = vmax.xlane.f32.xlu0 %v643
    %v645 = vpop.xlane.xlu0 %644
    %v646 = vsel %vm208, %v636, -inf
    %647 = vmax.xlane.f32.xlu0 %v646
    %v648 = vpop.xlane.xlu0 %647
    %v649 = vsub.f32 %v633, %v639
    %v650 = vsub.f32 %v634, %v642
    %v651 = vsub.f32 %v635, %v645
    %v652 = vsub.f32 %v636, %v648
    %v653 = vmul.f32 %v649, 1.442695
    %v654 = vpow.pop %v653
    %v655 = vmul.f32 %v650, 1.442695
    %v656 = vpow.pop %v655
    %v657 = vmul.f32 %v651, 1.442695
    %v658 = vpow.pop %v657
    %v659 = vmul.f32 %v652, 1.442695
    %v660 = vpow.pop %v659
    %v661 = vsel %vm208, %v654, 0.0
    %662 = vadd.xlane.f32.xlu0 %v661
    %v663 = vpop.xlane.xlu0 %662
    %v664 = vsel %vm208, %v656, 0.0
    %665 = vadd.xlane.f32.xlu0 %v664
    %v666 = vpop.xlane.xlu0 %665
    %v667 = vsel %vm208, %v658, 0.0
    %668 = vadd.xlane.f32.xlu0 %v667
    %v669 = vpop.xlane.xlu0 %668
    %v670 = vsel %vm208, %v660, 0.0
    %671 = vadd.xlane.f32.xlu0 %v670
    %v672 = vpop.xlane.xlu0 %671
    %v673 = vld [vmem:[#allocation2] sm:$0xff]
    %v674 = vld [vmem:[#allocation2 + $0x8] sm:$0xff]
    %v675 = vld [vmem:[#allocation2 + $0x10] sm:$0xff]
    %v676 = vld [vmem:[#allocation2 + $0x18] sm:$0xff]
    %vm677 = vcmask 64512
    %v679 = vsel %vm677, %v654, 0
    %681 = vmatprep.subr.mxu0 0.0
    %682 = vmatpush1.msra.mxu0 0.0
    %683 = vmatprep.subr.mxu0 0.0
    %684 = vmatpush1.msra.mxu0 0.0
    %685 = vmatprep.subr.mxu0 0.0
    %686 = vmatpush1.msra.mxu0 0.0
    %687 = vmatprep.subr.mxu0 0.0
    %688 = vmatpush1.msra.mxu0 0.0
    %689 = vmatprep.subr.mxu0 0.0
    %690 = vmatpush1.msra.mxu0 0.0
    %691 = vmatprep.subr.mxu0 0.0
    %692 = vmatpush1.msra.mxu0 0.0
    %693 = vmatprep.subr.mxu0 0.0
    %694 = vmatpush1.msra.mxu0 0.0
    %695 = vmatprep.subr.mxu0 0.0
    %696 = vmatpush1.msra.mxu0 0.0
    %697 = vmatprep.subr.mxu0 0.0
    %698 = vmatpush1.msra.mxu0 0.0
    %699 = vmatprep.subr.mxu0 0.0
    %700 = vmatpush1.msra.mxu0 0.0
    %701 = vmatprep.subr.mxu0 0.0
    %702 = vmatpush1.msra.mxu0 0.0
    %703 = vmatprep.subr.mxu0 0.0
    %704 = vmatpush1.msra.mxu0 0.0
    %705 = vmatprep.subr.mxu0 0.0
    %706 = vmatpush1.msra.mxu0 0.0
    %707 = vmatprep.subr.mxu0 0.0
    %708 = vmatpush1.msra.mxu0 0.0
    %709 = vmatprep.subr.mxu0 0.0
    %710 = vmatpush1.msra.mxu0 0.0
    %711 = vmatprep.subr.mxu0 0.0
    %712 = vmatpush1.msra.mxu0 %v673
    %713 = vmatprep.subr.mxu0 0.0
    %714 = vmatpush2.msra.mxu0 0.0
    %715 = vmatprep.subr.mxu0 0.0
    %716 = vmatpush2.msra.mxu0 0.0
    %717 = vmatprep.subr.mxu0 0.0
    %718 = vmatpush2.msra.mxu0 0.0
    %719 = vmatprep.subr.mxu0 0.0
    %720 = vmatpush2.msra.mxu0 0.0
    %721 = vmatprep.subr.mxu0 0.0
    %722 = vmatpush2.msra.mxu0 0.0
    %723 = vmatprep.subr.mxu0 0.0
    %724 = vmatpush2.msra.mxu0 0.0
    %725 = vmatprep.subr.mxu0 0.0
    %726 = vmatpush2.msra.mxu0 0.0
    %727 = vmatprep.subr.mxu0 0.0
    %728 = vmatpush2.msra.mxu0 0.0
    %729 = vmatprep.subr.mxu0 0.0
    %730 = vmatpush2.msra.mxu0 0.0
    %731 = vmatprep.subr.mxu0 0.0
    %732 = vmatpush2.msra.mxu0 0.0
    %733 = vmatprep.subr.mxu0 0.0
    %734 = vmatpush2.msra.mxu0 0.0
    %735 = vmatprep.subr.mxu0 0.0
    %736 = vmatpush2.msra.mxu0 0.0
    %737 = vmatprep.subr.mxu0 0.0
    %738 = vmatpush2.msra.mxu0 0.0
    %739 = vmatprep.subr.mxu0 0.0
    %740 = vmatpush2.msra.mxu0 0.0
    %741 = vmatprep.subr.mxu0 0.0
    %742 = vmatpush2.msra.mxu0 0.0
    %743 = vmatprep.subr.mxu0 0.0
    %744 = vmatpush2.msra.mxu0 0.0
    %745 = vmatprep.mubr.f32.mxu0 0.0
    %746 = vmatmul.mubr.f32.gmra.mxu0 %v679
    %v747 = vpop.f32.mrf.mxu0
    %v748 = vadd.f32 0.0, %v747
    %v749 = vpop.f32.mrf.mxu0
    %750 = vdwg.mxu0
    %v752 = vsel %vm677, %v656, 0
    %754 = vmatprep.subr.mxu0 0.0
    %755 = vmatpush1.msra.mxu0 0.0
    %756 = vmatprep.subr.mxu0 0.0
    %757 = vmatpush1.msra.mxu0 0.0
    %758 = vmatprep.subr.mxu0 0.0
    %759 = vmatpush1.msra.mxu0 0.0
    %760 = vmatprep.subr.mxu0 0.0
    %761 = vmatpush1.msra.mxu0 0.0
    %762 = vmatprep.subr.mxu0 0.0
    %763 = vmatpush1.msra.mxu0 0.0
    %764 = vmatprep.subr.mxu0 0.0
    %765 = vmatpush1.msra.mxu0 0.0
    %766 = vmatprep.subr.mxu0 0.0
    %767 = vmatpush1.msra.mxu0 0.0
    %768 = vmatprep.subr.mxu0 0.0
    %769 = vmatpush1.msra.mxu0 0.0
    %770 = vmatprep.subr.mxu0 0.0
    %771 = vmatpush1.msra.mxu0 0.0
    %772 = vmatprep.subr.mxu0 0.0
    %773 = vmatpush1.msra.mxu0 0.0
    %774 = vmatprep.subr.mxu0 0.0
    %775 = vmatpush1.msra.mxu0 0.0
    %776 = vmatprep.subr.mxu0 0.0
    %777 = vmatpush1.msra.mxu0 0.0
    %778 = vmatprep.subr.mxu0 0.0
    %779 = vmatpush1.msra.mxu0 0.0
    %780 = vmatprep.subr.mxu0 0.0
    %781 = vmatpush1.msra.mxu0 0.0
    %782 = vmatprep.subr.mxu0 0.0
    %783 = vmatpush1.msra.mxu0 0.0
    %784 = vmatprep.subr.mxu0 0.0
    %785 = vmatpush1.msra.mxu0 %v674
    %786 = vmatprep.subr.mxu0 0.0
    %787 = vmatpush2.msra.mxu0 0.0
    %788 = vmatprep.subr.mxu0 0.0
    %789 = vmatpush2.msra.mxu0 0.0
    %790 = vmatprep.subr.mxu0 0.0
    %791 = vmatpush2.msra.mxu0 0.0
    %792 = vmatprep.subr.mxu0 0.0
    %793 = vmatpush2.msra.mxu0 0.0
    %794 = vmatprep.subr.mxu0 0.0
    %795 = vmatpush2.msra.mxu0 0.0
    %796 = vmatprep.subr.mxu0 0.0
    %797 = vmatpush2.msra.mxu0 0.0
    %798 = vmatprep.subr.mxu0 0.0
    %799 = vmatpush2.msra.mxu0 0.0
    %800 = vmatprep.subr.mxu0 0.0
    %801 = vmatpush2.msra.mxu0 0.0
    %802 = vmatprep.subr.mxu0 0.0
    %803 = vmatpush2.msra.mxu0 0.0
    %804 = vmatprep.subr.mxu0 0.0
    %805 = vmatpush2.msra.mxu0 0.0
    %806 = vmatprep.subr.mxu0 0.0
    %807 = vmatpush2.msra.mxu0 0.0
    %808 = vmatprep.subr.mxu0 0.0
    %809 = vmatpush2.msra.mxu0 0.0
    %810 = vmatprep.subr.mxu0 0.0
    %811 = vmatpush2.msra.mxu0 0.0
    %812 = vmatprep.subr.mxu0 0.0
    %813 = vmatpush2.msra.mxu0 0.0
    %814 = vmatprep.subr.mxu0 0.0
    %815 = vmatpush2.msra.mxu0 0.0
    %816 = vmatprep.subr.mxu0 0.0
    %817 = vmatpush2.msra.mxu0 0.0
    %818 = vmatprep.mubr.f32.mxu0 0.0
    %819 = vmatmul.mubr.f32.gmra.mxu0 %v752
    %v820 = vpop.f32.mrf.mxu0
    %v821 = vadd.f32 0.0, %v820
    %v822 = vpop.f32.mrf.mxu0
    %823 = vdwg.mxu0
    %v825 = vsel %vm677, %v658, 0
    %827 = vmatprep.subr.mxu0 0.0
    %828 = vmatpush1.msra.mxu0 0.0
    %829 = vmatprep.subr.mxu0 0.0
    %830 = vmatpush1.msra.mxu0 0.0
    %831 = vmatprep.subr.mxu0 0.0
    %832 = vmatpush1.msra.mxu0 0.0
    %833 = vmatprep.subr.mxu0 0.0
    %834 = vmatpush1.msra.mxu0 0.0
    %835 = vmatprep.subr.mxu0 0.0
    %836 = vmatpush1.msra.mxu0 0.0
    %837 = vmatprep.subr.mxu0 0.0
    %838 = vmatpush1.msra.mxu0 0.0
    %839 = vmatprep.subr.mxu0 0.0
    %840 = vmatpush1.msra.mxu0 0.0
    %841 = vmatprep.subr.mxu0 0.0
    %842 = vmatpush1.msra.mxu0 0.0
    %843 = vmatprep.subr.mxu0 0.0
    %844 = vmatpush1.msra.mxu0 0.0
    %845 = vmatprep.subr.mxu0 0.0
    %846 = vmatpush1.msra.mxu0 0.0
    %847 = vmatprep.subr.mxu0 0.0
    %848 = vmatpush1.msra.mxu0 0.0
    %849 = vmatprep.subr.mxu0 0.0
    %850 = vmatpush1.msra.mxu0 0.0
    %851 = vmatprep.subr.mxu0 0.0
    %852 = vmatpush1.msra.mxu0 0.0
    %853 = vmatprep.subr.mxu0 0.0
    %854 = vmatpush1.msra.mxu0 0.0
    %855 = vmatprep.subr.mxu0 0.0
    %856 = vmatpush1.msra.mxu0 0.0
    %857 = vmatprep.subr.mxu0 0.0
    %858 = vmatpush1.msra.mxu0 %v675
    %859 = vmatprep.subr.mxu0 0.0
    %860 = vmatpush2.msra.mxu0 0.0
    %861 = vmatprep.subr.mxu0 0.0
    %862 = vmatpush2.msra.mxu0 0.0
    %863 = vmatprep.subr.mxu0 0.0
    %864 = vmatpush2.msra.mxu0 0.0
    %865 = vmatprep.subr.mxu0 0.0
    %866 = vmatpush2.msra.mxu0 0.0
    %867 = vmatprep.subr.mxu0 0.0
    %868 = vmatpush2.msra.mxu0 0.0
    %869 = vmatprep.subr.mxu0 0.0
    %870 = vmatpush2.msra.mxu0 0.0
    %871 = vmatprep.subr.mxu0 0.0
    %872 = vmatpush2.msra.mxu0 0.0
    %873 = vmatprep.subr.mxu0 0.0
    %874 = vmatpush2.msra.mxu0 0.0
    %875 = vmatprep.subr.mxu0 0.0
    %876 = vmatpush2.msra.mxu0 0.0
    %877 = vmatprep.subr.mxu0 0.0
    %878 = vmatpush2.msra.mxu0 0.0
    %879 = vmatprep.subr.mxu0 0.0
    %880 = vmatpush2.msra.mxu0 0.0
    %881 = vmatprep.subr.mxu0 0.0
    %882 = vmatpush2.msra.mxu0 0.0
    %883 = vmatprep.subr.mxu0 0.0
    %884 = vmatpush2.msra.mxu0 0.0
    %885 = vmatprep.subr.mxu0 0.0
    %886 = vmatpush2.msra.mxu0 0.0
    %887 = vmatprep.subr.mxu0 0.0
    %888 = vmatpush2.msra.mxu0 0.0
    %889 = vmatprep.subr.mxu0 0.0
    %890 = vmatpush2.msra.mxu0 0.0
    %891 = vmatprep.mubr.f32.mxu0 0.0
    %892 = vmatmul.mubr.f32.gmra.mxu0 %v825
    %v893 = vpop.f32.mrf.mxu0
    %v894 = vadd.f32 0.0, %v893
    %v895 = vpop.f32.mrf.mxu0
    %896 = vdwg.mxu0
    %v898 = vsel %vm677, %v660, 0
    %900 = vmatprep.subr.mxu0 0.0
    %901 = vmatpush1.msra.mxu0 0.0
    %902 = vmatprep.subr.mxu0 0.0
    %903 = vmatpush1.msra.mxu0 0.0
    %904 = vmatprep.subr.mxu0 0.0
    %905 = vmatpush1.msra.mxu0 0.0
    %906 = vmatprep.subr.mxu0 0.0
    %907 = vmatpush1.msra.mxu0 0.0
    %908 = vmatprep.subr.mxu0 0.0
    %909 = vmatpush1.msra.mxu0 0.0
    %910 = vmatprep.subr.mxu0 0.0
    %911 = vmatpush1.msra.mxu0 0.0
    %912 = vmatprep.subr.mxu0 0.0
    %913 = vmatpush1.msra.mxu0 0.0
    %914 = vmatprep.subr.mxu0 0.0
    %915 = vmatpush1.msra.mxu0 0.0
    %916 = vmatprep.subr.mxu0 0.0
    %917 = vmatpush1.msra.mxu0 0.0
    %918 = vmatprep.subr.mxu0 0.0
    %919 = vmatpush1.msra.mxu0 0.0
    %920 = vmatprep.subr.mxu0 0.0
    %921 = vmatpush1.msra.mxu0 0.0
    %922 = vmatprep.subr.mxu0 0.0
    %923 = vmatpush1.msra.mxu0 0.0
    %924 = vmatprep.subr.mxu0 0.0
    %925 = vmatpush1.msra.mxu0 0.0
    %926 = vmatprep.subr.mxu0 0.0
    %927 = vmatpush1.msra.mxu0 0.0
    %928 = vmatprep.subr.mxu0 0.0
    %929 = vmatpush1.msra.mxu0 0.0
    %930 = vmatprep.subr.mxu0 0.0
    %931 = vmatpush1.msra.mxu0 %v676
    %932 = vmatprep.subr.mxu0 0.0
    %933 = vmatpush2.msra.mxu0 0.0
    %934 = vmatprep.subr.mxu0 0.0
    %935 = vmatpush2.msra.mxu0 0.0
    %936 = vmatprep.subr.mxu0 0.0
    %937 = vmatpush2.msra.mxu0 0.0
    %938 = vmatprep.subr.mxu0 0.0
    %939 = vmatpush2.msra.mxu0 0.0
    %940 = vmatprep.subr.mxu0 0.0
    %941 = vmatpush2.msra.mxu0 0.0
    %942 = vmatprep.subr.mxu0 0.0
    %943 = vmatpush2.msra.mxu0 0.0
    %944 = vmatprep.subr.mxu0 0.0
    %945 = vmatpush2.msra.mxu0 0.0
    %946 = vmatprep.subr.mxu0 0.0
    %947 = vmatpush2.msra.mxu0 0.0
    %948 = vmatprep.subr.mxu0 0.0
    %949 = vmatpush2.msra.mxu0 0.0
    %950 = vmatprep.subr.mxu0 0.0
    %951 = vmatpush2.msra.mxu0 0.0
    %952 = vmatprep.subr.mxu0 0.0
    %953 = vmatpush2.msra.mxu0 0.0
    %954 = vmatprep.subr.mxu0 0.0
    %955 = vmatpush2.msra.mxu0 0.0
    %956 = vmatprep.subr.mxu0 0.0
    %957 = vmatpush2.msra.mxu0 0.0
    %958 = vmatprep.subr.mxu0 0.0
    %959 = vmatpush2.msra.mxu0 0.0
    %960 = vmatprep.subr.mxu0 0.0
    %961 = vmatpush2.msra.mxu0 0.0
    %962 = vmatprep.subr.mxu0 0.0
    %963 = vmatpush2.msra.mxu0 0.0
    %964 = vmatprep.mubr.f32.mxu0 0.0
    %965 = vmatmul.mubr.f32.gmra.mxu0 %v898
    %v966 = vpop.f32.mrf.mxu0
    %v967 = vadd.f32 0.0, %v966
    %v968 = vpop.f32.mrf.mxu0
    %969 = vdwg.mxu0
    %v970 = vrcp.pop %v663
    %v971 = vmul.f32 1.0, %v970
    %v972 = vrcp.pop %v666
    %v973 = vmul.f32 1.0, %v972
    %v974 = vrcp.pop %v669
    %v975 = vmul.f32 1.0, %v974
    %v976 = vrcp.pop %v672
    %v977 = vmul.f32 1.0, %v976
    %v978 = vmul.f32 %v748, %v971
    %v979 = vmul.f32 %v821, %v973
    %v980 = vmul.f32 %v894, %v975
    %v981 = vmul.f32 %v967, %v977
    %vm982 = vcmask 253952
    %983 = vst.msk [vmem:[#allocation5] sm:$0x1] %vm982, %v978
    %984 = vst.msk [vmem:[#allocation5 + $0x1] sm:$0x1] %vm982, %v979
    %985 = vst.msk [vmem:[#allocation5 + $0x2] sm:$0x1] %vm982, %v980
    %986 = vst.msk [vmem:[#allocation5 + $0x3] sm:$0x1] %vm982, %v981
    // Predicated region
    $region30: #{_camil_forward.1} parent=1 // pred_check
      _
    $region31: #{_camil_forward.1} parent=1 // pred_check_branch
      %988 = sbr.rel (0) target = $region33
    $region32: #{_camil_forward.1} parent=1 // pred_region
      %s990 = ssub.s32 64, 64
      %991 = vsyncadd [#allocation4], %s990
      %s992 = sshll.u32 [#allocation5], 4
      %s993 = int_to_ptr.vmem [resolvable:$true] %s992
      %998 = dma.vmem_to_hbm [thread:$0]  %s993, 64, %s6, [#allocation4], 16, 16, 1
    $region33: #{_camil_forward.1} parent=1 // pred_fallthru
      _
    // Predicated region
    $region34: #{_camil_forward.1} parent=1 // pred_check
      _
    $region35: #{_camil_forward.1} parent=1 // pred_check_branch
      %1000 = sbr.rel (0) target = $region37
    $region36: #{_camil_forward.1} parent=1 // pred_region
      %s1002 = ssub.s32 64, 64
      %1003 = vsyncadd [#allocation7], %s1002
      %s1004 = sshll.u32 [#allocation6], 4
      %s1005 = int_to_ptr.vmem [resolvable:$true] %s1004
      %1010 = dma.vmem_to_hbm [thread:$0]  %s1005, 64, %s7, [#allocation7], 16, 16, 1
    $region37: #{_camil_forward.1} parent=1 // pred_fallthru
      _
    // Predicated region
    $region38: #{_camil_forward.1} parent=1 // pred_check
      _
    $region39: #{_camil_forward.1} parent=1 // pred_check_branch
      %1012 = sbr.rel (0) target = $region41
    $region40: #{_camil_forward.1} parent=1 // pred_region
      %1013 = dma.done [#allocation4], 64
    $region41: #{_camil_forward.1} parent=1 // pred_fallthru
      _
    // Predicated region
    $region42: #{_camil_forward.1} parent=1 // pred_check
      _
    $region43: #{_camil_forward.1} parent=1 // pred_check_branch
      %1015 = sbr.rel (0) target = $region45
    $region44: #{_camil_forward.1} parent=1 // pred_region
      %1016 = dma.done [#allocation7], 64
    $region45: #{_camil_forward.1} parent=1 // pred_fallthru
      _
    %1017 = vsyncpa [#allocation3], 1
    %1018 = vsyncpa [#allocation4], 1
    %1019 = vsyncpa [#allocation7], 1

// kernel: _camil_forward.1
$region0: #{_camil_forward.1}
  #allocation0 [shape = 'u32[]', space=smem, size = 0x4, offset = 0x4, fixed_abs, tag = 'smem constant byte address 0x4 - core index']
  #allocation1 [shape = 'u32[144,128]{1,0:T(1,128)}', space=vmem, size = 0x12000, scoped, tag = 'internal scratch']
  %s0 = inlined_call_operand.vmem [shape: f32[32,32], index: 0, kind: input, shape index: {}]
  %s1 = inlined_call_operand.hbm [shape: f32[4,8,32], index: 1, kind: input, shape index: {}]
  %s2 = inlined_call_operand.vmem [shape: f32[4,1,8], index: 2, kind: input, shape index: {}]
  %s3 = inlined_call_operand.vmem [shape: f32[32,16], index: 3, kind: input, shape index: {}]
  %s4 = inlined_call_operand.vmem [shape: f32[1,16], index: 4, kind: input, shape index: {}]
  %s5 = inlined_call_operand.vmem [shape: f32[1,16], index: 5, kind: input, shape index: {}]
  %s6 = inlined_call_operand.hbm [shape: f32[4,1,32], index: 6, kind: output, shape index: {0}]
  %s7 = inlined_call_operand.hbm [shape: f32[4,1,8], index: 7, kind: output, shape index: {1}]
  %8 = xla_tuple %s6, %s7
  %s9 = sld [smem:[#allocation0]]
  $region46: #{_camil_forward.1} parent=0
    _
  %s11 = ssub.s32 1, %s9
  %s12 = scalar_select 0, %s11, %s9
  $region1: #{_camil_forward.1} parent=0
    #allocation2 [shape = 'u8[16384]{0}', space=vmem, size = 0x4000, scoped, tag = 'input window, operand 1, single buffered']
    #allocation3 [shape = 's32[1]{0}', space=sflag, size = 0x4, scoped, tag = 'scoped memory for _camil_forward.1']
    #allocation4 [shape = 's32[1]{0}', space=sflag, size = 0x4, scoped, tag = 'scoped memory for _camil_forward.1']
    #allocation5 [shape = 'u8[2048]{0}', space=vmem, size = 0x800, scoped, tag = 'output window, operand 0, single buffered']
    #allocation6 [shape = 'u8[2048]{0}', space=vmem, size = 0x800, scoped, tag = 'output window, operand 1, single buffered']
    #allocation7 [shape = 's32[1]{0}', space=sflag, size = 0x4, scoped, tag = 'scoped memory for _camil_forward.1']
    %13 = vsyncpa [#allocation3], 0
    %14 = vsyncpa [#allocation4], 0
    %15 = vsyncpa [#allocation7], 0
    // Predicated region
    $region2: #{_camil_forward.1} parent=1 // pred_check
      _
    $region3: #{_camil_forward.1} parent=1 // pred_check_branch
      %17 = sbr.rel (0) target = $region5
    $region4: #{_camil_forward.1} parent=1 // pred_region
      _
    $region5: #{_camil_forward.1} parent=1 // pred_fallthru
      _
    // Predicated region
    $region6: #{_camil_forward.1} parent=1 // pred_check
      _
    $region7: #{_camil_forward.1} parent=1 // pred_check_branch
      %19 = sbr.rel (0) target = $region9
    $region8: #{_camil_forward.1} parent=1 // pred_region
      %s21 = ssub.s32 512, 512
      %22 = vsyncadd [#allocation3], %s21
      %s23 = sshll.u32 [#allocation2], 4
      %s24 = int_to_ptr.vmem [resolvable:$true] %s23
      %29 = dma.hbm_to_vmem [thread:$0]  %s1, 512, %s24, [#allocation3], 128, 128, 8
    $region9: #{_camil_forward.1} parent=1 // pred_fallthru
      _
    // Predicated region
    $region10: #{_camil_forward.1} parent=1 // pred_check
      _
    $region11: #{_camil_forward.1} parent=1 // pred_check_branch
      %31 = sbr.rel (0) target = $region13
    $region12: #{_camil_forward.1} parent=1 // pred_region
      _
    $region13: #{_camil_forward.1} parent=1 // pred_fallthru
      _
    // Predicated region
    $region14: #{_camil_forward.1} parent=1 // pred_check
      _
    $region15: #{_camil_forward.1} parent=1 // pred_check_branch
      %33 = sbr.rel (0) target = $region17
    $region16: #{_camil_forward.1} parent=1 // pred_region
      _
    $region17: #{_camil_forward.1} parent=1 // pred_fallthru
      _
    // Predicated region
    $region18: #{_camil_forward.1} parent=1 // pred_check
      _
    $region19: #{_camil_forward.1} parent=1 // pred_check_branch
      %35 = sbr.rel (0) target = $region21
    $region20: #{_camil_forward.1} parent=1 // pred_region
      _
    $region21: #{_camil_forward.1} parent=1 // pred_fallthru
      _
    // Predicated region
    $region22: #{_camil_forward.1} parent=1 // pred_check
      _
    $region23: #{_camil_forward.1} parent=1 // pred_check_branch
      %37 = sbr.rel (0) target = $region25
    $region24: #{_camil_forward.1} parent=1 // pred_region
      _
    $region25: #{_camil_forward.1} parent=1 // pred_fallthru
      _
    // Predicated region
    $region26: #{_camil_forward.1} parent=1 // pred_check
      _
    $region27: #{_camil_forward.1} parent=1 // pred_check_branch
      %39 = sbr.rel (0) target = $region29
    $region28: #{_camil_forward.1} parent=1 // pred_region
      %40 = dma.done [#allocation3], 512
    $region29: #{_camil_forward.1} parent=1 // pred_fallthru
      _
    %v41 = vld [vmem:[%s0] sm:$0xff]
    %v42 = vld [vmem:[%s0 + $0x8] sm:$0xff]
    %v43 = vld [vmem:[%s0 + $0x10] sm:$0xff]
    %v44 = vld [vmem:[%s0 + $0x18] sm:$0xff]
    %v45 = vld [vmem:[%s3] sm:$0xff]
    %v46 = vld [vmem:[%s3 + $0x8] sm:$0xff]
    %v47 = vld [vmem:[%s3 + $0x10] sm:$0xff]
    %v48 = vld [vmem:[%s3 + $0x18] sm:$0xff]
    %v49 = vld [vmem:[%s4] sm:$0x1]
    %v51 = vlaneseq
    %v52 = vshrl.u32 %v51, 7
    %v53 = vsub.s32 0, %v52
    %v54 = vrot.slane %v49, %v53
    %vm56 = vcmask 261120
    %v58 = vsel %vm56, %v41, 0
    %v61 = vsel %vm56, %v42, 0
    %v64 = vsel %vm56, %v43, 0
    %v67 = vsel %vm56, %v44, 0
    %69 = vmatprep.subr.mxu0 0.0
    %70 = vmatpush1.msra.mxu0 0.0
    %71 = vmatprep.subr.mxu0 0.0
    %72 = vmatpush1.msra.mxu0 0.0
    %73 = vmatprep.subr.mxu0 0.0
    %74 = vmatpush1.msra.mxu0 0.0
    %75 = vmatprep.subr.mxu0 0.0
    %76 = vmatpush1.msra.mxu0 0.0
    %77 = vmatprep.subr.mxu0 0.0
    %78 = vmatpush1.msra.mxu0 0.0
    %79 = vmatprep.subr.mxu0 0.0
    %80 = vmatpush1.msra.mxu0 0.0
    %81 = vmatprep.subr.mxu0 0.0
    %82 = vmatpush1.msra.mxu0 0.0
    %83 = vmatprep.subr.mxu0 0.0
    %84 = vmatpush1.msra.mxu0 0.0
    %85 = vmatprep.subr.mxu0 0.0
    %86 = vmatpush1.msra.mxu0 0.0
    %87 = vmatprep.subr.mxu0 0.0
    %88 = vmatpush1.msra.mxu0 0.0
    %89 = vmatprep.subr.mxu0 0.0
    %90 = vmatpush1.msra.mxu0 0.0
    %91 = vmatprep.subr.mxu0 0.0
    %92 = vmatpush1.msra.mxu0 0.0
    %93 = vmatprep.subr.mxu0 0.0
    %94 = vmatpush1.msra.mxu0 %v48
    %95 = vmatprep.subr.mxu0 0.0
    %96 = vmatpush1.msra.mxu0 %v47
    %97 = vmatprep.subr.mxu0 0.0
    %98 = vmatpush1.msra.mxu0 %v46
    %99 = vmatprep.subr.mxu0 0.0
    %100 = vmatpush1.msra.mxu0 %v45
    %101 = vmatprep.subr.mxu0 0.0
    %102 = vmatpush2.msra.mxu0 0.0
    %103 = vmatprep.subr.mxu0 0.0
    %104 = vmatpush2.msra.mxu0 0.0
    %105 = vmatprep.subr.mxu0 0.0
    %106 = vmatpush2.msra.mxu0 0.0
    %107 = vmatprep.subr.mxu0 0.0
    %108 = vmatpush2.msra.mxu0 0.0
    %109 = vmatprep.subr.mxu0 0.0
    %110 = vmatpush2.msra.mxu0 0.0
    %111 = vmatprep.subr.mxu0 0.0
    %112 = vmatpush2.msra.mxu0 0.0
    %113 = vmatprep.subr.mxu0 0.0
    %114 = vmatpush2.msra.mxu0 0.0
    %115 = vmatprep.subr.mxu0 0.0
    %116 = vmatpush2.msra.mxu0 0.0
    %117 = vmatprep.subr.mxu0 0.0
    %118 = vmatpush2.msra.mxu0 0.0
    %119 = vmatprep.subr.mxu0 0.0
    %120 = vmatpush2.msra.mxu0 0.0
    %121 = vmatprep.subr.mxu0 0.0
    %122 = vmatpush2.msra.mxu0 0.0
    %123 = vmatprep.subr.mxu0 0.0
    %124 = vmatpush2.msra.mxu0 0.0
    %125 = vmatprep.subr.mxu0 0.0
    %126 = vmatpush2.msra.mxu0 0.0
    %127 = vmatprep.subr.mxu0 0.0
    %128 = vmatpush2.msra.mxu0 0.0
    %129 = vmatprep.subr.mxu0 0.0
    %130 = vmatpush2.msra.mxu0 0.0
    %131 = vmatprep.subr.mxu0 0.0
    %132 = vmatpush2.msra.mxu0 0.0
    %133 = vmatprep.mubr.f32.mxu0 0.0
    %134 = vmatmul.mubr.f32.gmra.mxu0 %v58
    %v135 = vpop.f32.mrf.mxu0
    %v136 = vadd.f32 %v54, %v135
    %v137 = vpop.f32.mrf.mxu0
    %138 = vmatprep.mubr.f32.mxu0 0.0
    %139 = vmatmul.mubr.f32.gmra.mxu0 %v61
    %v140 = vpop.f32.mrf.mxu0
    %v141 = vadd.f32 %v54, %v140
    %v142 = vpop.f32.mrf.mxu0
    %143 = vmatprep.mubr.f32.mxu0 0.0
    %144 = vmatmul.mubr.f32.gmra.mxu0 %v64
    %v145 = vpop.f32.mrf.mxu0
    %v146 = vadd.f32 %v54, %v145
    %v147 = vpop.f32.mrf.mxu0
    %148 = vmatprep.mubr.f32.mxu0 0.0
    %149 = vmatmul.mubr.f32.gmra.mxu0 %v67
    %v150 = vpop.f32.mrf.mxu0
    %v151 = vadd.f32 %v54, %v150
    %v152 = vpop.f32.mrf.mxu0
    %153 = vdwg.mxu0
    %v154 = vtanh.pop %v136
    %v155 = vtanh.pop %v141
    %v156 = vtanh.pop %v146
    %v157 = vtanh.pop %v151
    %v158 = vld [vmem:[%s5] sm:$0x1]
    %v160 = vlaneseq
    %v161 = vshrl.u32 %v160, 7
    %v162 = vsub.s32 0, %v161
    %v163 = vrot.slane %v158, %v162
    %v165 = vmul.f32 %v154, %v163
    %v166 = vmul.f32 %v155, %v163
    %v167 = vmul.f32 %v156, %v163
    %v168 = vmul.f32 %v157, %v163
    %vm169 = vcmask 130048
    %v170 = vsel %vm169, %v165, 0.0
    %171 = vadd.xlane.f32.xlu0 %v170
    %v172 = vpop.xlane.xlu0 %171
    %v173 = vsel %vm169, %v166, 0.0
    %174 = vadd.xlane.f32.xlu0 %v173
    %v175 = vpop.xlane.xlu0 %174
    %v176 = vsel %vm169, %v167, 0.0
    %177 = vadd.xlane.f32.xlu0 %v176
    %v178 = vpop.xlane.xlu0 %177
    %v179 = vsel %vm169, %v168, 0.0
    %180 = vadd.xlane.f32.xlu0 %v179
    %v181 = vpop.xlane.xlu0 %180
    %v186 = vlaneseq
    %v187 = vand.u32 %v186, 127
    %v188 = vlaneseq
    %v189 = vshrl.u32 %v188, 7
    %v190 = vsub.s32 %v187, %v189
    %v191 = vrot.slane %v172, %v190
    %v192 = vlaneseq
    %v193 = vshrl.u32 %v192, 7
    %v194 = vsub.s32 %v187, %v193
    %v195 = vrot.slane %v175, %v194
    %v196 = vlaneseq
    %v197 = vshrl.u32 %v196, 7
    %v198 = vsub.s32 %v187, %v197
    %v199 = vrot.slane %v178, %v198
    %v200 = vlaneseq
    %v201 = vshrl.u32 %v200, 7
    %v202 = vsub.s32 %v187, %v201
    %v203 = vrot.slane %v181, %v202
    %vm208 = vcmask 57344
    %209 = vst.msk [vmem:[#allocation6] sm:$0x1] %vm208, %v191
    %210 = vst.msk [vmem:[#allocation6 + $0x1] sm:$0x1] %vm208, %v195
    %211 = vst.msk [vmem:[#allocation6 + $0x2] sm:$0x1] %vm208, %v199
    %212 = vst.msk [vmem:[#allocation6 + $0x3] sm:$0x1] %vm208, %v203
    %v213 = vld [vmem:[%s2] sm:$0x1]
    %v214 = vld [vmem:[%s2 + $0x1] sm:$0x1]
    %v215 = vld [vmem:[%s2 + $0x2] sm:$0x1]
    %v216 = vld [vmem:[%s2 + $0x3] sm:$0x1]
    %vm217 = vcmp.gt.f32.partialorder %v213, 0.0
    %vm218 = vcmp.gt.f32.partialorder %v214, 0.0
    %vm219 = vcmp.gt.f32.partialorder %v215, 0.0
    %vm220 = vcmp.gt.f32.partialorder %v216, 0.0
    %v221 = vlaneseq
    %v222 = vshrl.u32 %v221, 7
    %v223 = vsub.s32 0, %v222
    %v224 = vrot.slane %v172, %v223
    %v225 = vlaneseq
    %v226 = vshrl.u32 %v225, 7
    %v227 = vsub.s32 1, %v226
    %v228 = vrot.slane %v172, %v227
    %v229 = vlaneseq
    %v230 = vshrl.u32 %v229, 7
    %v231 = vsub.s32 2, %v230
    %v232 = vrot.slane %v172, %v231
    %v233 = vlaneseq
    %v234 = vshrl.u32 %v233, 7
    %v235 = vsub.s32 3, %v234
    %v236 = vrot.slane %v172, %v235
    %v237 = vlaneseq
    %v238 = vshrl.u32 %v237, 7
    %v239 = vsub.s32 4, %v238
    %v240 = vrot.slane %v172, %v239
    %v241 = vlaneseq
    %v242 = vshrl.u32 %v241, 7
    %v243 = vsub.s32 5, %v242
    %v244 = vrot.slane %v172, %v243
    %v245 = vlaneseq
    %v246 = vshrl.u32 %v245, 7
    %v247 = vsub.s32 6, %v246
    %v248 = vrot.slane %v172, %v247
    %v249 = vlaneseq
    %v250 = vshrl.u32 %v249, 7
    %v251 = vsub.s32 7, %v250
    %v252 = vrot.slane %v172, %v251
    %v253 = vlaneseq
    %v254 = vshrl.u32 %v253, 7
    %v255 = vsub.s32 0, %v254
    %v256 = vrot.slane %v175, %v255
    %v257 = vlaneseq
    %v258 = vshrl.u32 %v257, 7
    %v259 = vsub.s32 1, %v258
    %v260 = vrot.slane %v175, %v259
    %v261 = vlaneseq
    %v262 = vshrl.u32 %v261, 7
    %v263 = vsub.s32 2, %v262
    %v264 = vrot.slane %v175, %v263
    %v265 = vlaneseq
    %v266 = vshrl.u32 %v265, 7
    %v267 = vsub.s32 3, %v266
    %v268 = vrot.slane %v175, %v267
    %v269 = vlaneseq
    %v270 = vshrl.u32 %v269, 7
    %v271 = vsub.s32 4, %v270
    %v272 = vrot.slane %v175, %v271
    %v273 = vlaneseq
    %v274 = vshrl.u32 %v273, 7
    %v275 = vsub.s32 5, %v274
    %v276 = vrot.slane %v175, %v275
    %v277 = vlaneseq
    %v278 = vshrl.u32 %v277, 7
    %v279 = vsub.s32 6, %v278
    %v280 = vrot.slane %v175, %v279
    %v281 = vlaneseq
    %v282 = vshrl.u32 %v281, 7
    %v283 = vsub.s32 7, %v282
    %v284 = vrot.slane %v175, %v283
    %v285 = vlaneseq
    %v286 = vshrl.u32 %v285, 7
    %v287 = vsub.s32 0, %v286
    %v288 = vrot.slane %v178, %v287
    %v289 = vlaneseq
    %v290 = vshrl.u32 %v289, 7
    %v291 = vsub.s32 1, %v290
    %v292 = vrot.slane %v178, %v291
    %v293 = vlaneseq
    %v294 = vshrl.u32 %v293, 7
    %v295 = vsub.s32 2, %v294
    %v296 = vrot.slane %v178, %v295
    %v297 = vlaneseq
    %v298 = vshrl.u32 %v297, 7
    %v299 = vsub.s32 3, %v298
    %v300 = vrot.slane %v178, %v299
    %v301 = vlaneseq
    %v302 = vshrl.u32 %v301, 7
    %v303 = vsub.s32 4, %v302
    %v304 = vrot.slane %v178, %v303
    %v305 = vlaneseq
    %v306 = vshrl.u32 %v305, 7
    %v307 = vsub.s32 5, %v306
    %v308 = vrot.slane %v178, %v307
    %v309 = vlaneseq
    %v310 = vshrl.u32 %v309, 7
    %v311 = vsub.s32 6, %v310
    %v312 = vrot.slane %v178, %v311
    %v313 = vlaneseq
    %v314 = vshrl.u32 %v313, 7
    %v315 = vsub.s32 7, %v314
    %v316 = vrot.slane %v178, %v315
    %v317 = vlaneseq
    %v318 = vshrl.u32 %v317, 7
    %v319 = vsub.s32 0, %v318
    %v320 = vrot.slane %v181, %v319
    %v321 = vlaneseq
    %v322 = vshrl.u32 %v321, 7
    %v323 = vsub.s32 1, %v322
    %v324 = vrot.slane %v181, %v323
    %v325 = vlaneseq
    %v326 = vshrl.u32 %v325, 7
    %v327 = vsub.s32 2, %v326
    %v328 = vrot.slane %v181, %v327
    %v329 = vlaneseq
    %v330 = vshrl.u32 %v329, 7
    %v331 = vsub.s32 3, %v330
    %v332 = vrot.slane %v181, %v331
    %v333 = vlaneseq
    %v334 = vshrl.u32 %v333, 7
    %v335 = vsub.s32 4, %v334
    %v336 = vrot.slane %v181, %v335
    %v337 = vlaneseq
    %v338 = vshrl.u32 %v337, 7
    %v339 = vsub.s32 5, %v338
    %v340 = vrot.slane %v181, %v339
    %v341 = vlaneseq
    %v342 = vshrl.u32 %v341, 7
    %v343 = vsub.s32 6, %v342
    %v344 = vrot.slane %v181, %v343
    %v345 = vlaneseq
    %v346 = vshrl.u32 %v345, 7
    %v347 = vsub.s32 7, %v346
    %v348 = vrot.slane %v181, %v347
    %v349 = vcombine.low %v224, %v228
    %v350 = vcombine.low %v232, %v236
    %v351 = vcombine.low %v240, %v244
    %v352 = vcombine.low %v248, %v252
    %v354 = vunpack.c.l.s4 1966171168
    %v355 = vunpack.c.0.s8 %v354
    %v356 = vlaneseq
    %v357 = vshrl.u32 %v356, 7
    %v358 = vsub.s32 %v355, %v357
    %v359 = vrot.slane %v349, %v358
    %v361 = vunpack.c.l.s4 1966171168
    %v362 = vunpack.c.0.s8 %v361
    %v363 = vlaneseq
    %v364 = vshrl.u32 %v363, 7
    %v365 = vsub.s32 %v362, %v364
    %v366 = vrot.slane %v350, %v365
    %v368 = vunpack.c.l.s4 1966171168
    %v369 = vunpack.c.0.s8 %v368
    %v370 = vlaneseq
    %v371 = vshrl.u32 %v370, 7
    %v372 = vsub.s32 %v369, %v371
    %v373 = vrot.slane %v351, %v372
    %v375 = vunpack.c.l.s4 1966171168
    %v376 = vunpack.c.0.s8 %v375
    %v377 = vlaneseq
    %v378 = vshrl.u32 %v377, 7
    %v379 = vsub.s32 %v376, %v378
    %v380 = vrot.slane %v352, %v379
    %v381 = vcombine.low %v359, %v366
    %v382 = vcombine.low %v373, %v380
    %v384 = vunpack.c.l.s4 1966171168
    %v385 = vunpack.c.0.s8 %v384
    %v386 = vlaneseq
    %v387 = vshrl.u32 %v386, 7
    %v388 = vsub.s32 %v385, %v387
    %v389 = vrot.slane %v381, %v388
    %v391 = vunpack.c.l.s4 1966171168
    %v392 = vunpack.c.0.s8 %v391
    %v393 = vlaneseq
    %v394 = vshrl.u32 %v393, 7
    %v395 = vsub.s32 %v392, %v394
    %v396 = vrot.slane %v382, %v395
    %v397 = vcombine.low %v389, %v396
    %v398 = vcombine.low %v256, %v260
    %v399 = vcombine.low %v264, %v268
    %v400 = vcombine.low %v272, %v276
    %v401 = vcombine.low %v280, %v284
    %v403 = vunpack.c.l.s4 1966171168
    %v404 = vunpack.c.0.s8 %v403
    %v405 = vlaneseq
    %v406 = vshrl.u32 %v405, 7
    %v407 = vsub.s32 %v404, %v406
    %v408 = vrot.slane %v398, %v407
    %v410 = vunpack.c.l.s4 1966171168
    %v411 = vunpack.c.0.s8 %v410
    %v412 = vlaneseq
    %v413 = vshrl.u32 %v412, 7
    %v414 = vsub.s32 %v411, %v413
    %v415 = vrot.slane %v399, %v414
    %v417 = vunpack.c.l.s4 1966171168
    %v418 = vunpack.c.0.s8 %v417
    %v419 = vlaneseq
    %v420 = vshrl.u32 %v419, 7
    %v421 = vsub.s32 %v418, %v420
    %v422 = vrot.slane %v400, %v421
    %v424 = vunpack.c.l.s4 1966171168
    %v425 = vunpack.c.0.s8 %v424
    %v426 = vlaneseq
    %v427 = vshrl.u32 %v426, 7
    %v428 = vsub.s32 %v425, %v427
    %v429 = vrot.slane %v401, %v428
    %v430 = vcombine.low %v408, %v415
    %v431 = vcombine.low %v422, %v429
    %v433 = vunpack.c.l.s4 1966171168
    %v434 = vunpack.c.0.s8 %v433
    %v435 = vlaneseq
    %v436 = vshrl.u32 %v435, 7
    %v437 = vsub.s32 %v434, %v436
    %v438 = vrot.slane %v430, %v437
    %v440 = vunpack.c.l.s4 1966171168
    %v441 = vunpack.c.0.s8 %v440
    %v442 = vlaneseq
    %v443 = vshrl.u32 %v442, 7
    %v444 = vsub.s32 %v441, %v443
    %v445 = vrot.slane %v431, %v444
    %v446 = vcombine.low %v438, %v445
    %v447 = vcombine.low %v288, %v292
    %v448 = vcombine.low %v296, %v300
    %v449 = vcombine.low %v304, %v308
    %v450 = vcombine.low %v312, %v316
    %v452 = vunpack.c.l.s4 1966171168
    %v453 = vunpack.c.0.s8 %v452
    %v454 = vlaneseq
    %v455 = vshrl.u32 %v454, 7
    %v456 = vsub.s32 %v453, %v455
    %v457 = vrot.slane %v447, %v456
    %v459 = vunpack.c.l.s4 1966171168
    %v460 = vunpack.c.0.s8 %v459
    %v461 = vlaneseq
    %v462 = vshrl.u32 %v461, 7
    %v463 = vsub.s32 %v460, %v462
    %v464 = vrot.slane %v448, %v463
    %v466 = vunpack.c.l.s4 1966171168
    %v467 = vunpack.c.0.s8 %v466
    %v468 = vlaneseq
    %v469 = vshrl.u32 %v468, 7
    %v470 = vsub.s32 %v467, %v469
    %v471 = vrot.slane %v449, %v470
    %v473 = vunpack.c.l.s4 1966171168
    %v474 = vunpack.c.0.s8 %v473
    %v475 = vlaneseq
    %v476 = vshrl.u32 %v475, 7
    %v477 = vsub.s32 %v474, %v476
    %v478 = vrot.slane %v450, %v477
    %v479 = vcombine.low %v457, %v464
    %v480 = vcombine.low %v471, %v478
    %v482 = vunpack.c.l.s4 1966171168
    %v483 = vunpack.c.0.s8 %v482
    %v484 = vlaneseq
    %v485 = vshrl.u32 %v484, 7
    %v486 = vsub.s32 %v483, %v485
    %v487 = vrot.slane %v479, %v486
    %v489 = vunpack.c.l.s4 1966171168
    %v490 = vunpack.c.0.s8 %v489
    %v491 = vlaneseq
    %v492 = vshrl.u32 %v491, 7
    %v493 = vsub.s32 %v490, %v492
    %v494 = vrot.slane %v480, %v493
    %v495 = vcombine.low %v487, %v494
    %v496 = vcombine.low %v320, %v324
    %v497 = vcombine.low %v328, %v332
    %v498 = vcombine.low %v336, %v340
    %v499 = vcombine.low %v344, %v348
    %v501 = vunpack.c.l.s4 1966171168
    %v502 = vunpack.c.0.s8 %v501
    %v503 = vlaneseq
    %v504 = vshrl.u32 %v503, 7
    %v505 = vsub.s32 %v502, %v504
    %v506 = vrot.slane %v496, %v505
    %v508 = vunpack.c.l.s4 1966171168
    %v509 = vunpack.c.0.s8 %v508
    %v510 = vlaneseq
    %v511 = vshrl.u32 %v510, 7
    %v512 = vsub.s32 %v509, %v511
    %v513 = vrot.slane %v497, %v512
    %v515 = vunpack.c.l.s4 1966171168
    %v516 = vunpack.c.0.s8 %v515
    %v517 = vlaneseq
    %v518 = vshrl.u32 %v517, 7
    %v519 = vsub.s32 %v516, %v518
    %v520 = vrot.slane %v498, %v519
    %v522 = vunpack.c.l.s4 1966171168
    %v523 = vunpack.c.0.s8 %v522
    %v524 = vlaneseq
    %v525 = vshrl.u32 %v524, 7
    %v526 = vsub.s32 %v523, %v525
    %v527 = vrot.slane %v499, %v526
    %v528 = vcombine.low %v506, %v513
    %v529 = vcombine.low %v520, %v527
    %v531 = vunpack.c.l.s4 1966171168
    %v532 = vunpack.c.0.s8 %v531
    %v533 = vlaneseq
    %v534 = vshrl.u32 %v533, 7
    %v535 = vsub.s32 %v532, %v534
    %v536 = vrot.slane %v528, %v535
    %v538 = vunpack.c.l.s4 1966171168
    %v539 = vunpack.c.0.s8 %v538
    %v540 = vlaneseq
    %v541 = vshrl.u32 %v540, 7
    %v542 = vsub.s32 %v539, %v541
    %v543 = vrot.slane %v529, %v542
    %v544 = vcombine.low %v536, %v543
    %545 = vset.pattern.permute.xlu0 0
    %546 = vperm.xlu0 %545, %v397
    %v547 = vpop.permute.xlu0 %546
    %548 = vset.pattern.permute.xlu0 0
    %549 = vperm.xlu0 %548, %v446
    %v550 = vpop.permute.xlu0 %549
    %551 = vset.pattern.permute.xlu0 0
    %552 = vperm.xlu0 %551, %v495
    %v553 = vpop.permute.xlu0 %552
    %554 = vset.pattern.permute.xlu0 0
    %555 = vperm.xlu0 %554, %v544
    %v556 = vpop.permute.xlu0 %555
    %v557 = vlaneseq
    %v558 = vshrl.u32 %v557, 7
    %v559 = vsub.s32 %v187, %v558
    %v560 = vrot.slane %v547, %v559
    %v561 = vlaneseq
    %v562 = vshrl.u32 %v561, 7
    %v563 = vsub.s32 %v187, %v562
    %v564 = vrot.slane %v550, %v563
    %v565 = vlaneseq
    %v566 = vshrl.u32 %v565, 7
    %v567 = vsub.s32 %v187, %v566
    %v568 = vrot.slane %v553, %v567
    %v569 = vlaneseq
    %v570 = vshrl.u32 %v569, 7
    %v571 = vsub.s32 %v187, %v570
    %v572 = vrot.slane %v556, %v571
    %v574 = vunpack.c.l.s4 1966171168
    %v575 = vunpack.c.0.s8 %v574
    %v576 = vlaneseq
    %v577 = vshrl.u32 %v576, 7
    %v578 = vsub.s32 %v575, %v577
    %v579 = vrot.slane %v560, %v578
    %v581 = vunpack.c.l.s4 1966171168
    %v582 = vunpack.c.0.s8 %v581
    %v583 = vlaneseq
    %v584 = vshrl.u32 %v583, 7
    %v585 = vsub.s32 %v582, %v584
    %v586 = vrot.slane %v579, %v585
    %v588 = vunpack.c.l.s4 1966171168
    %v589 = vunpack.c.0.s8 %v588
    %v590 = vlaneseq
    %v591 = vshrl.u32 %v590, 7
    %v592 = vsub.s32 %v589, %v591
    %v593 = vrot.slane %v564, %v592
    %v595 = vunpack.c.l.s4 1966171168
    %v596 = vunpack.c.0.s8 %v595
    %v597 = vlaneseq
    %v598 = vshrl.u32 %v597, 7
    %v599 = vsub.s32 %v596, %v598
    %v600 = vrot.slane %v593, %v599
    %v602 = vunpack.c.l.s4 1966171168
    %v603 = vunpack.c.0.s8 %v602
    %v604 = vlaneseq
    %v605 = vshrl.u32 %v604, 7
    %v606 = vsub.s32 %v603, %v605
    %v607 = vrot.slane %v568, %v606
    %v609 = vunpack.c.l.s4 1966171168
    %v610 = vunpack.c.0.s8 %v609
    %v611 = vlaneseq
    %v612 = vshrl.u32 %v611, 7
    %v613 = vsub.s32 %v610, %v612
    %v614 = vrot.slane %v607, %v613
    %v616 = vunpack.c.l.s4 1966171168
    %v617 = vunpack.c.0.s8 %v616
    %v618 = vlaneseq
    %v619 = vshrl.u32 %v618, 7
    %v620 = vsub.s32 %v617, %v619
    %v621 = vrot.slane %v572, %v620
    %v623 = vunpack.c.l.s4 1966171168
    %v624 = vunpack.c.0.s8 %v623
    %v625 = vlaneseq
    %v626 = vshrl.u32 %v625, 7
    %v627 = vsub.s32 %v624, %v626
    %v628 = vrot.slane %v621, %v627
    %v633 = vsel %vm217, %v586, -1e+30
    %v634 = vsel %vm218, %v600, -1e+30
    %v635 = vsel %vm219, %v614, -1e+30
    %v636 = vsel %vm220, %v628, -1e+30
    %v637 = vsel %vm208, %v633, -inf
    %638 = vmax.xlane.f32.xlu0 %v637
    %v639 = vpop.xlane.xlu0 %638
    %v640 = vsel %vm208, %v634, -inf
    %641 = vmax.xlane.f32.xlu0 %v640
    %v642 = vpop.xlane.xlu0 %641
    %v643 = vsel %vm208, %v635, -inf
    %644 = vmax.xlane.f32.xlu0 %v643
    %v645 = vpop.xlane.xlu0 %644
    %v646 = vsel %vm208, %v636, -inf
    %647 = vmax.xlane.f32.xlu0 %v646
    %v648 = vpop.xlane.xlu0 %647
    %v649 = vsub.f32 %v633, %v639
    %v650 = vsub.f32 %v634, %v642
    %v651 = vsub.f32 %v635, %v645
    %v652 = vsub.f32 %v636, %v648
    %v653 = vmul.f32 %v649, 1.442695
    %v654 = vpow.pop %v653
    %v655 = vmul.f32 %v650, 1.442695
    %v656 = vpow.pop %v655
    %v657 = vmul.f32 %v651, 1.442695
    %v658 = vpow.pop %v657
    %v659 = vmul.f32 %v652, 1.442695
    %v660 = vpow.pop %v659
    %v661 = vsel %vm208, %v654, 0.0
    %662 = vadd.xlane.f32.xlu0 %v661
    %v663 = vpop.xlane.xlu0 %662
    %v664 = vsel %vm208, %v656, 0.0
    %665 = vadd.xlane.f32.xlu0 %v664
    %v666 = vpop.xlane.xlu0 %665
    %v667 = vsel %vm208, %v658, 0.0
    %668 = vadd.xlane.f32.xlu0 %v667
    %v669 = vpop.xlane.xlu0 %668
    %v670 = vsel %vm208, %v660, 0.0
    %671 = vadd.xlane.f32.xlu0 %v670
    %v672 = vpop.xlane.xlu0 %671
    %v673 = vld [vmem:[#allocation2] sm:$0xff]
    %v674 = vld [vmem:[#allocation2 + $0x8] sm:$0xff]
    %v675 = vld [vmem:[#allocation2 + $0x10] sm:$0xff]
    %v676 = vld [vmem:[#allocation2 + $0x18] sm:$0xff]
    %vm677 = vcmask 64512
    %v679 = vsel %vm677, %v654, 0
    %681 = vmatprep.subr.mxu0 0.0
    %682 = vmatpush1.msra.mxu0 0.0
    %683 = vmatprep.subr.mxu0 0.0
    %684 = vmatpush1.msra.mxu0 0.0
    %685 = vmatprep.subr.mxu0 0.0
    %686 = vmatpush1.msra.mxu0 0.0
    %687 = vmatprep.subr.mxu0 0.0
    %688 = vmatpush1.msra.mxu0 0.0
    %689 = vmatprep.subr.mxu0 0.0
    %690 = vmatpush1.msra.mxu0 0.0
    %691 = vmatprep.subr.mxu0 0.0
    %692 = vmatpush1.msra.mxu0 0.0
    %693 = vmatprep.subr.mxu0 0.0
    %694 = vmatpush1.msra.mxu0 0.0
    %695 = vmatprep.subr.mxu0 0.0
    %696 = vmatpush1.msra.mxu0 0.0
    %697 = vmatprep.subr.mxu0 0.0
    %698 = vmatpush1.msra.mxu0 0.0
    %699 = vmatprep.subr.mxu0 0.0
    %700 = vmatpush1.msra.mxu0 0.0
    %701 = vmatprep.subr.mxu0 0.0
    %702 = vmatpush1.msra.mxu0 0.0
    %703 = vmatprep.subr.mxu0 0.0
    %704 = vmatpush1.msra.mxu0 0.0
    %705 = vmatprep.subr.mxu0 0.0
    %706 = vmatpush1.msra.mxu0 0.0
    %707 = vmatprep.subr.mxu0 0.0
    %708 = vmatpush1.msra.mxu0 0.0
    %709 = vmatprep.subr.mxu0 0.0
    %710 = vmatpush1.msra.mxu0 0.0
    %711 = vmatprep.subr.mxu0 0.0
    %712 = vmatpush1.msra.mxu0 %v673
    %713 = vmatprep.subr.mxu0 0.0
    %714 = vmatpush2.msra.mxu0 0.0
    %715 = vmatprep.subr.mxu0 0.0
    %716 = vmatpush2.msra.mxu0 0.0
    %717 = vmatprep.subr.mxu0 0.0
    %718 = vmatpush2.msra.mxu0 0.0
    %719 = vmatprep.subr.mxu0 0.0
    %720 = vmatpush2.msra.mxu0 0.0
    %721 = vmatprep.subr.mxu0 0.0
    %722 = vmatpush2.msra.mxu0 0.0
    %723 = vmatprep.subr.mxu0 0.0
    %724 = vmatpush2.msra.mxu0 0.0
    %725 = vmatprep.subr.mxu0 0.0
    %726 = vmatpush2.msra.mxu0 0.0
    %727 = vmatprep.subr.mxu0 0.0
    %728 = vmatpush2.msra.mxu0 0.0
    %729 = vmatprep.subr.mxu0 0.0
    %730 = vmatpush2.msra.mxu0 0.0
    %731 = vmatprep.subr.mxu0 0.0
    %732 = vmatpush2.msra.mxu0 0.0
    %733 = vmatprep.subr.mxu0 0.0
    %734 = vmatpush2.msra.mxu0 0.0
    %735 = vmatprep.subr.mxu0 0.0
    %736 = vmatpush2.msra.mxu0 0.0
    %737 = vmatprep.subr.mxu0 0.0
    %738 = vmatpush2.msra.mxu0 0.0
    %739 = vmatprep.subr.mxu0 0.0
    %740 = vmatpush2.msra.mxu0 0.0
    %741 = vmatprep.subr.mxu0 0.0
    %742 = vmatpush2.msra.mxu0 0.0
    %743 = vmatprep.subr.mxu0 0.0
    %744 = vmatpush2.msra.mxu0 0.0
    %745 = vmatprep.mubr.f32.mxu0 0.0
    %746 = vmatmul.mubr.f32.gmra.mxu0 %v679
    %v747 = vpop.f32.mrf.mxu0
    %v748 = vadd.f32 0.0, %v747
    %v749 = vpop.f32.mrf.mxu0
    %750 = vdwg.mxu0
    %v752 = vsel %vm677, %v656, 0
    %754 = vmatprep.subr.mxu0 0.0
    %755 = vmatpush1.msra.mxu0 0.0
    %756 = vmatprep.subr.mxu0 0.0
    %757 = vmatpush1.msra.mxu0 0.0
    %758 = vmatprep.subr.mxu0 0.0
    %759 = vmatpush1.msra.mxu0 0.0
    %760 = vmatprep.subr.mxu0 0.0
    %761 = vmatpush1.msra.mxu0 0.0
    %762 = vmatprep.subr.mxu0 0.0
    %763 = vmatpush1.msra.mxu0 0.0
    %764 = vmatprep.subr.mxu0 0.0
    %765 = vmatpush1.msra.mxu0 0.0
    %766 = vmatprep.subr.mxu0 0.0
    %767 = vmatpush1.msra.mxu0 0.0
    %768 = vmatprep.subr.mxu0 0.0
    %769 = vmatpush1.msra.mxu0 0.0
    %770 = vmatprep.subr.mxu0 0.0
    %771 = vmatpush1.msra.mxu0 0.0
    %772 = vmatprep.subr.mxu0 0.0
    %773 = vmatpush1.msra.mxu0 0.0
    %774 = vmatprep.subr.mxu0 0.0
    %775 = vmatpush1.msra.mxu0 0.0
    %776 = vmatprep.subr.mxu0 0.0
    %777 = vmatpush1.msra.mxu0 0.0
    %778 = vmatprep.subr.mxu0 0.0
    %779 = vmatpush1.msra.mxu0 0.0
    %780 = vmatprep.subr.mxu0 0.0
    %781 = vmatpush1.msra.mxu0 0.0
    %782 = vmatprep.subr.mxu0 0.0
    %783 = vmatpush1.msra.mxu0 0.0
    %784 = vmatprep.subr.mxu0 0.0
    %785 = vmatpush1.msra.mxu0 %v674
    %786 = vmatprep.subr.mxu0 0.0
    %787 = vmatpush2.msra.mxu0 0.0
    %788 = vmatprep.subr.mxu0 0.0
    %789 = vmatpush2.msra.mxu0 0.0
    %790 = vmatprep.subr.mxu0 0.0
    %791 = vmatpush2.msra.mxu0 0.0
    %792 = vmatprep.subr.mxu0 0.0
    %793 = vmatpush2.msra.mxu0 0.0
    %794 = vmatprep.subr.mxu0 0.0
    %795 = vmatpush2.msra.mxu0 0.0
    %796 = vmatprep.subr.mxu0 0.0
    %797 = vmatpush2.msra.mxu0 0.0
    %798 = vmatprep.subr.mxu0 0.0
    %799 = vmatpush2.msra.mxu0 0.0
    %800 = vmatprep.subr.mxu0 0.0
    %801 = vmatpush2.msra.mxu0 0.0
    %802 = vmatprep.subr.mxu0 0.0
    %803 = vmatpush2.msra.mxu0 0.0
    %804 = vmatprep.subr.mxu0 0.0
    %805 = vmatpush2.msra.mxu0 0.0
    %806 = vmatprep.subr.mxu0 0.0
    %807 = vmatpush2.msra.mxu0 0.0
    %808 = vmatprep.subr.mxu0 0.0
    %809 = vmatpush2.msra.mxu0 0.0
    %810 = vmatprep.subr.mxu0 0.0
    %811 = vmatpush2.msra.mxu0 0.0
    %812 = vmatprep.subr.mxu0 0.0
    %813 = vmatpush2.msra.mxu0 0.0
    %814 = vmatprep.subr.mxu0 0.0
    %815 = vmatpush2.msra.mxu0 0.0
    %816 = vmatprep.subr.mxu0 0.0
    %817 = vmatpush2.msra.mxu0 0.0
    %818 = vmatprep.mubr.f32.mxu0 0.0
    %819 = vmatmul.mubr.f32.gmra.mxu0 %v752
    %v820 = vpop.f32.mrf.mxu0
    %v821 = vadd.f32 0.0, %v820
    %v822 = vpop.f32.mrf.mxu0
    %823 = vdwg.mxu0
    %v825 = vsel %vm677, %v658, 0
    %827 = vmatprep.subr.mxu0 0.0
    %828 = vmatpush1.msra.mxu0 0.0
    %829 = vmatprep.subr.mxu0 0.0
    %830 = vmatpush1.msra.mxu0 0.0
    %831 = vmatprep.subr.mxu0 0.0
    %832 = vmatpush1.msra.mxu0 0.0
    %833 = vmatprep.subr.mxu0 0.0
    %834 = vmatpush1.msra.mxu0 0.0
    %835 = vmatprep.subr.mxu0 0.0
    %836 = vmatpush1.msra.mxu0 0.0
    %837 = vmatprep.subr.mxu0 0.0
    %838 = vmatpush1.msra.mxu0 0.0
    %839 = vmatprep.subr.mxu0 0.0
    %840 = vmatpush1.msra.mxu0 0.0
    %841 = vmatprep.subr.mxu0 0.0
    %842 = vmatpush1.msra.mxu0 0.0
    %843 = vmatprep.subr.mxu0 0.0
    %844 = vmatpush1.msra.mxu0 0.0
    %845 = vmatprep.subr.mxu0 0.0
    %846 = vmatpush1.msra.mxu0 0.0
    %847 = vmatprep.subr.mxu0 0.0
    %848 = vmatpush1.msra.mxu0 0.0
    %849 = vmatprep.subr.mxu0 0.0
    %850 = vmatpush1.msra.mxu0 0.0
    %851 = vmatprep.subr.mxu0 0.0
    %852 = vmatpush1.msra.mxu0 0.0
    %853 = vmatprep.subr.mxu0 0.0
    %854 = vmatpush1.msra.mxu0 0.0
    %855 = vmatprep.subr.mxu0 0.0
    %856 = vmatpush1.msra.mxu0 0.0
    %857 = vmatprep.subr.mxu0 0.0
    %858 = vmatpush1.msra.mxu0 %v675
    %859 = vmatprep.subr.mxu0 0.0
    %860 = vmatpush2.msra.mxu0 0.0
    %861 = vmatprep.subr.mxu0 0.0
    %862 = vmatpush2.msra.mxu0 0.0
    %863 = vmatprep.subr.mxu0 0.0
    %864 = vmatpush2.msra.mxu0 0.0
    %865 = vmatprep.subr.mxu0 0.0
    %866 = vmatpush2.msra.mxu0 0.0
    %867 = vmatprep.subr.mxu0 0.0
    %868 = vmatpush2.msra.mxu0 0.0
    %869 = vmatprep.subr.mxu0 0.0
    %870 = vmatpush2.msra.mxu0 0.0
    %871 = vmatprep.subr.mxu0 0.0
    %872 = vmatpush2.msra.mxu0 0.0
    %873 = vmatprep.subr.mxu0 0.0
    %874 = vmatpush2.msra.mxu0 0.0
    %875 = vmatprep.subr.mxu0 0.0
    %876 = vmatpush2.msra.mxu0 0.0
    %877 = vmatprep.subr.mxu0 0.0
    %878 = vmatpush2.msra.mxu0 0.0
    %879 = vmatprep.subr.mxu0 0.0
    %880 = vmatpush2.msra.mxu0 0.0
    %881 = vmatprep.subr.mxu0 0.0
    %882 = vmatpush2.msra.mxu0 0.0
    %883 = vmatprep.subr.mxu0 0.0
    %884 = vmatpush2.msra.mxu0 0.0
    %885 = vmatprep.subr.mxu0 0.0
    %886 = vmatpush2.msra.mxu0 0.0
    %887 = vmatprep.subr.mxu0 0.0
    %888 = vmatpush2.msra.mxu0 0.0
    %889 = vmatprep.subr.mxu0 0.0
    %890 = vmatpush2.msra.mxu0 0.0
    %891 = vmatprep.mubr.f32.mxu0 0.0
    %892 = vmatmul.mubr.f32.gmra.mxu0 %v825
    %v893 = vpop.f32.mrf.mxu0
    %v894 = vadd.f32 0.0, %v893
    %v895 = vpop.f32.mrf.mxu0
    %896 = vdwg.mxu0
    %v898 = vsel %vm677, %v660, 0
    %900 = vmatprep.subr.mxu0 0.0
    %901 = vmatpush1.msra.mxu0 0.0
    %902 = vmatprep.subr.mxu0 0.0
    %903 = vmatpush1.msra.mxu0 0.0
    %904 = vmatprep.subr.mxu0 0.0
    %905 = vmatpush1.msra.mxu0 0.0
    %906 = vmatprep.subr.mxu0 0.0
    %907 = vmatpush1.msra.mxu0 0.0
    %908 = vmatprep.subr.mxu0 0.0
    %909 = vmatpush1.msra.mxu0 0.0
    %910 = vmatprep.subr.mxu0 0.0
    %911 = vmatpush1.msra.mxu0 0.0
    %912 = vmatprep.subr.mxu0 0.0
    %913 = vmatpush1.msra.mxu0 0.0
    %914 = vmatprep.subr.mxu0 0.0
    %915 = vmatpush1.msra.mxu0 0.0
    %916 = vmatprep.subr.mxu0 0.0
    %917 = vmatpush1.msra.mxu0 0.0
    %918 = vmatprep.subr.mxu0 0.0
    %919 = vmatpush1.msra.mxu0 0.0
    %920 = vmatprep.subr.mxu0 0.0
    %921 = vmatpush1.msra.mxu0 0.0
    %922 = vmatprep.subr.mxu0 0.0
    %923 = vmatpush1.msra.mxu0 0.0
    %924 = vmatprep.subr.mxu0 0.0
    %925 = vmatpush1.msra.mxu0 0.0
    %926 = vmatprep.subr.mxu0 0.0
    %927 = vmatpush1.msra.mxu0 0.0
    %928 = vmatprep.subr.mxu0 0.0
    %929 = vmatpush1.msra.mxu0 0.0
    %930 = vmatprep.subr.mxu0 0.0
    %931 = vmatpush1.msra.mxu0 %v676
    %932 = vmatprep.subr.mxu0 0.0
    %933 = vmatpush2.msra.mxu0 0.0
    %934 = vmatprep.subr.mxu0 0.0
    %935 = vmatpush2.msra.mxu0 0.0
    %936 = vmatprep.subr.mxu0 0.0
    %937 = vmatpush2.msra.mxu0 0.0
    %938 = vmatprep.subr.mxu0 0.0
    %939 = vmatpush2.msra.mxu0 0.0
    %940 = vmatprep.subr.mxu0 0.0
    %941 = vmatpush2.msra.mxu0 0.0
    %942 = vmatprep.subr.mxu0 0.0
    %943 = vmatpush2.msra.mxu0 0.0
    %944 = vmatprep.subr.mxu0 0.0
    %945 = vmatpush2.msra.mxu0 0.0
    %946 = vmatprep.subr.mxu0 0.0
    %947 = vmatpush2.msra.mxu0 0.0
    %948 = vmatprep.subr.mxu0 0.0
    %949 = vmatpush2.msra.mxu0 0.0
    %950 = vmatprep.subr.mxu0 0.0
    %951 = vmatpush2.msra.mxu0 0.0
    %952 = vmatprep.subr.mxu0 0.0
    %953 = vmatpush2.msra.mxu0 0.0
    %954 = vmatprep.subr.mxu0 0.0
    %955 = vmatpush2.msra.mxu0 0.0
    %956 = vmatprep.subr.mxu0 0.0
    %957 = vmatpush2.msra.mxu0 0.0
    %958 = vmatprep.subr.mxu0 0.0
    %959 = vmatpush2.msra.mxu0 0.0
    %960 = vmatprep.subr.mxu0 0.0
    %961 = vmatpush2.msra.mxu0 0.0
    %962 = vmatprep.subr.mxu0 0.0
    %963 = vmatpush2.msra.mxu0 0.0
    %964 = vmatprep.mubr.f32.mxu0 0.0
    %965 = vmatmul.mubr.f32.gmra.mxu0 %v898
    %v966 = vpop.f32.mrf.mxu0
    %v967 = vadd.f32 0.0, %v966
    %v968 = vpop.f32.mrf.mxu0
    %969 = vdwg.mxu0
    %v970 = vrcp.pop %v663
    %v971 = vmul.f32 1.0, %v970
    %v972 = vrcp.pop %v666
    %v973 = vmul.f32 1.0, %v972
    %v974 = vrcp.pop %v669
    %v975 = vmul.f32 1.0, %v974
    %v976 = vrcp.pop %v672
    %v977 = vmul.f32 1.0, %v976
    %v978 = vmul.f32 %v748, %v971
    %v979 = vmul.f32 %v821, %v973
    %v980 = vmul.f32 %v894, %v975
    %v981 = vmul.f32 %v967, %v977
    %vm982 = vcmask 253952
    %983 = vst.msk [vmem:[#allocation5] sm:$0x1] %vm982, %v978
    %984 = vst.msk [vmem:[#allocation5 + $0x1] sm:$0x1] %vm982, %v979
    %985 = vst.msk [vmem:[#allocation5 + $0x2] sm:$0x1] %vm982, %v980
    %986 = vst.msk [vmem:[#allocation5 + $0x3] sm:$0x1] %vm982, %v981
    // Predicated region
    $region30: #{_camil_forward.1} parent=1 // pred_check
      _
    $region31: #{_camil_forward.1} parent=1 // pred_check_branch
      %988 = sbr.rel (0) target = $region33
    $region32: #{_camil_forward.1} parent=1 // pred_region
      %s990 = ssub.s32 64, 64
      %991 = vsyncadd [#allocation4], %s990
      %s992 = sshll.u32 [#allocation5], 4
      %s993 = int_to_ptr.vmem [resolvable:$true] %s992
      %998 = dma.vmem_to_hbm [thread:$0]  %s993, 64, %s6, [#allocation4], 16, 16, 1
    $region33: #{_camil_forward.1} parent=1 // pred_fallthru
      _
    // Predicated region
    $region34: #{_camil_forward.1} parent=1 // pred_check
      _
    $region35: #{_camil_forward.1} parent=1 // pred_check_branch
      %1000 = sbr.rel (0) target = $region37
    $region36: #{_camil_forward.1} parent=1 // pred_region
      %s1002 = ssub.s32 64, 64
      %1003 = vsyncadd [#allocation7], %s1002
      %s1004 = sshll.u32 [#allocation6], 4
      %s1005 = int_to_ptr.vmem [resolvable:$true] %s1004
      %1010 = dma.vmem_to_hbm [thread:$0]  %s1005, 64, %s7, [#allocation7], 16, 16, 1
    $region37: #{_camil_forward.1} parent=1 // pred_fallthru
      _
    // Predicated region
    $region38: #{_camil_forward.1} parent=1 // pred_check
      _
    $region39: #{_camil_forward.1} parent=1 // pred_check_branch
      %1012 = sbr.rel (0) target = $region41
    $region40: #{_camil_forward.1} parent=1 // pred_region
      %1013 = dma.done [#allocation4], 64
    $region41: #{_camil_forward.1} parent=1 // pred_fallthru
      _
    // Predicated region
    $region42: #{_camil_forward.1} parent=1 // pred_check
      _
    $region43: #{_camil_forward.1} parent=1 // pred_check_branch
      %1015 = sbr.rel (0) target = $region45
    $region44: #{_camil_forward.1} parent=1 // pred_region
      %1016 = dma.done [#allocation7], 64
    $region45: #{_camil_forward.1} parent=1 // pred_fallthru
      _
    %1017 = vsyncpa [#allocation3], 1
    %1018 = vsyncpa [#allocation4], 1
    %1019 = vsyncpa [#allocation7], 1

</llo_original>
